<compile_context>
chip_gen: v7x
topology: tpu7x:2x2x1
jax: 0.10.0
libtpu: 0.0.40
codegen_flags: <defaults>
</compile_context>

<pallas_src>
import jax
import jax.numpy as jnp
import numpy as np
from jax.experimental import pallas as pl
from jax.experimental.pallas import tpu as pltpu

# ---------------- config (consistent with CBAMLayer defaults) ----------------
B, C, H, W = 2, 32, 16, 16          # channel=32, reduction=16 -> hidden=2
REDUCTION = 16
CR = C // REDUCTION
KSP = 7                              # spatial_kernel
PAD = KSP // 2
HW = H * W                           # 256 -> lane-dense last dim
MARGIN = 128                         # zero margin around the flat spatial map
                                     # (>= PAD*(W+1); multiple of 128 keeps the
                                     # interior store / margin zeroing aligned)


def _tensorcores_per_chip():
    """Best-effort core count per chip; falls back to 1 (always correct)."""
    try:
        kind = jax.devices()[0].device_kind.lower()
    except Exception:
        return 1
    return 2 if any(t in kind for t in ("v7", "v4", "v5p")) else 1


# ------------------------------ wrapper / kernel -----------------------------
def cbam_pallas(x, w1, w2, wsp):
    # x: (B, C, H, W); w1: (CR, C); w2: (C, CR); wsp: (2, KSP, KSP)
    b, c, h, w = x.shape
    hw = h * w
    cr = w1.shape[0]
    assert c % 8 == 0 and hw % 128 == 0, "(8,128) tiling of the (C, H*W) block"
    assert MARGIN % 128 == 0 and MARGIN >= PAD * (w + 1)

    # One grid step per TensorCore: whole batch in one step on single-TC
    # chips; split across the two TCs on multi-core chips.
    steps = 2 if (_tensorcores_per_chip() >= 2 and b >= 2 and b % 2 == 0) else 1
    bb = b // steps

    x_flat = x.reshape(b, c, hw)          # free: NCHW contiguous over (H, W)
    w1t = jnp.transpose(w1)               # (C, CR)

    # Spatial conv weights as per-tap columns; rows grouped as
    # [chmax-branch (wsp[0]) x bb, chmean-branch (wsp[1]) x bb].
    w_max = jnp.tile(wsp[0].reshape(1, KSP * KSP), (bb, 1))
    w_mean = jnp.tile(wsp[1].reshape(1, KSP * KSP), (bb, 1))
    wsp_cols = jnp.concatenate([w_max, w_mean], axis=0)       # (2*bb, 49)

    # Per-kw column-validity masks, built on the host (works for any W).
    cols = np.arange(hw) % w
    cmask_np = np.zeros((KSP, hw), np.float32)
    for kw in range(KSP):
        dw = kw - PAD
        cmask_np[kw] = ((cols >= max(0, -dw)) &
                        (cols < min(w, w - dw))).astype(np.float32)
    cmask = jnp.asarray(cmask_np)

    def kernel(x_ref, w1t_ref, w2_ref, wsp_ref, cmask_ref, o_ref, pad_ref):
        # Re-zero only the margins each step; the interior is fully rewritten.
        pad_ref[:, :MARGIN] = jnp.zeros((2 * bb, MARGIN), jnp.float32)
        pad_ref[:, MARGIN + hw:] = jnp.zeros((2 * bb, MARGIN), jnp.float32)

        inv_hw = 1.0 / hw
        inv_c = 1.0 / c

        # ---- channel attention (per batch row; VPU/XLU only, no MXU) ----
        x2s = []
        for bi in range(bb):
            xb = x_ref[bi].astype(jnp.float32)                  # (C, HW)
            maxp = jnp.max(xb, axis=1, keepdims=True)           # (C, 1)
            avgp = jnp.sum(xb, axis=1, keepdims=True) * inv_hw  # (C, 1)
            sel = jax.lax.broadcasted_iota(jnp.int32, (c, 2), 1) == 0
            pooled = jnp.where(sel, maxp, avgp)                 # (C, 2) [max|avg]

            # ca = sigmoid(W2 @ relu(W1 @ max) + W2 @ relu(W1 @ avg))
            #    = sigmoid(sum_j W2[:, j] * (relu_hid[j, max] + relu_hid[j, avg]))
            zsum = jnp.zeros((c, 1), jnp.float32)
            for j in range(cr):
                w1j = w1t_ref[:, j:j + 1]                        # (C, 1)
                hj = jnp.sum(w1j * pooled, axis=0, keepdims=True)   # (1, 2)
                hj = jnp.maximum(hj, 0.0)
                hsum = jnp.sum(hj, axis=1, keepdims=True)        # (1, 1)
                zsum = zsum + w2_ref[:, j:j + 1] * hsum
            ca = jax.nn.sigmoid(zsum)                            # (C, 1)

            x2 = xb * ca                                         # (C, HW)
            x2s.append(x2)

            chmax = jnp.max(x2, axis=0, keepdims=True)           # (1, HW)
            chmean = jnp.sum(x2, axis=0, keepdims=True) * inv_c  # (1, HW)
            pad_ref[bi:bi + 1, MARGIN:MARGIN + hw] = chmax
            pad_ref[bb + bi:bb + bi + 1, MARGIN:MARGIN + hw] = chmean

        # ---- spatial attention: 7x7 "same" conv in the flat layout ----
        # Each tap: one fused (2*bb, HW) slice * one (2*bb, 1) weight column.
        # kw outermost: the column mask is applied once per kw (7x, not 49x)
        # and the 7 partials keep independent add chains.  Row under/overflow
        # always lands in the zero margin, so no row mask is needed.
        acc2 = jnp.zeros((2 * bb, hw), jnp.float32)
        for kw in range(KSP):
            dw = kw - PAD
            partial = jnp.zeros((2 * bb, hw), jnp.float32)
            for kh in range(KSP):
                st = MARGIN + (kh - PAD) * w + dw                # static offset
                tap = pad_ref[:, st:st + hw]                     # (2*bb, HW)
                t = kh * KSP + kw
                partial = partial + wsp_ref[:, t:t + 1] * tap
            acc2 = acc2 + partial * cmask_ref[kw:kw + 1, :]

        # ---- combine branches, sigmoid, dense unmasked output stores ----
        for bi in range(bb):
            conv = acc2[bi:bi + 1, :] + acc2[bb + bi:bb + bi + 1, :]   # (1, HW)
            sa = jax.nn.sigmoid(conv)
            o_ref[bi] = (x2s[bi] * sa).astype(o_ref.dtype)

    out_flat = pl.pallas_call(
        kernel,
        out_shape=jax.ShapeDtypeStruct((b, c, hw), x.dtype),
        grid_spec=pltpu.PrefetchScalarGridSpec(
            num_scalar_prefetch=0,
            grid=(steps,),
            in_specs=[
                pl.BlockSpec((bb, c, hw), lambda i: (i, 0, 0)),
                pl.BlockSpec((c, cr), lambda i: (0, 0)),          # w1^T
                pl.BlockSpec((c, cr), lambda i: (0, 0)),          # w2
                pl.BlockSpec((2 * bb, KSP * KSP), lambda i: (0, 0)),  # conv cols
                pl.BlockSpec((KSP, hw), lambda i: (0, 0)),        # col masks
            ],
            out_specs=pl.BlockSpec((bb, c, hw), lambda i: (i, 0, 0)),
            scratch_shapes=[pltpu.VMEM((2 * bb, hw + 2 * MARGIN), jnp.float32)],
        ),
        compiler_params=pltpu.CompilerParams(
            dimension_semantics=("parallel",)),   # splits steps across TCs
    )(x_flat, w1t, w2, wsp_cols, cmask)
    return out_flat.reshape(b, c, h, w)
    # TODO(synk): if upstream activations are bf16, keep x/out bf16 end-to-end
    # (upcast only pooled scalars and the conv accumulator); inputs here are f32.


# --------------------------- pure-JAX reference --------------------------------
def cbam_ref(x, w1, w2, wsp):
    maxp = jnp.max(x, axis=(2, 3))                          # (B, C)
    avgp = jnp.mean(x, axis=(2, 3))                         # (B, C)

    def mlp(v):                                             # v: (B, C)
        return jax.nn.relu(v @ w1.T) @ w2.T

    ca = jax.nn.sigmoid(mlp(maxp) + mlp(avgp))              # (B, C)
    x2 = x * ca[:, :, None, None]

    chmax = jnp.max(x2, axis=1, keepdims=True)
    chmean = jnp.mean(x2, axis=1, keepdims=True)
    m = jnp.concatenate([chmax, chmean], axis=1)            # (B, 2, H, W)
    conv = jax.lax.conv_general_dilated(
        m, wsp.reshape(1, 2, KSP, KSP), (1, 1),
        padding=((PAD, PAD), (PAD, PAD)),
        dimension_numbers=("NCHW", "OIHW", "NCHW"))
    sa = jax.nn.sigmoid(conv)                               # (B, 1, H, W)
    return x2 * sa


# --------------------------------- main ----------------------------------------
if __name__ == "__main__":
    key = jax.random.PRNGKey(0)
    k1, k2, k3, kx = jax.random.split(key, 4)
    w1 = jax.random.normal(k1, (CR, C), jnp.float32) * 0.1
    w2 = jax.random.normal(k2, (C, CR), jnp.float32) * 0.1
    wsp = jax.random.normal(k3, (2, KSP, KSP), jnp.float32) * 0.1
    x = jax.random.normal(kx, (B, C, H, W), jnp.float32)

    out = jax.block_until_ready(cbam_pallas(x, w1, w2, wsp))
    ref = jax.block_until_ready(cbam_ref(x, w1, w2, wsp))
    np.testing.assert_allclose(np.asarray(out), np.asarray(ref),
                               rtol=1e-4, atol=1e-5)
    print("KERNEL_OK")
</pallas_src>

<mosaic_0001>
module attributes {stable_mosaic.version = 11 : i64} {
  func.func @kernel(%arg0: i32, %arg1: memref<2x32x256xf32, #tpu.memory_space<vmem>>, %arg2: memref<32x2xf32, #tpu.memory_space<vmem>>, %arg3: memref<32x2xf32, #tpu.memory_space<vmem>>, %arg4: memref<4x49xf32, #tpu.memory_space<vmem>>, %arg5: memref<7x256xf32, #tpu.memory_space<vmem>>, %arg6: memref<2x32x256xf32, #tpu.memory_space<vmem>>, %arg7: memref<4x512xf32, #tpu.memory_space<vmem>>) attributes {dimension_semantics = [#tpu.dimension_semantics<parallel>], iteration_bounds = array<i64: 1>, scalar_prefetch = 0 : i64, scratch_operands = 1 : i64, tpu.core_type = #tpu.core_type<tc>, window_params = [{transform_indices = @transform_0, window_bounds = array<i64: 2, 32, 256>}, {pipeline_mode = #tpu.pipeline_mode<synchronous>, transform_indices = @transform_1, window_bounds = array<i64: 32, 2>}, {pipeline_mode = #tpu.pipeline_mode<synchronous>, transform_indices = @transform_2, window_bounds = array<i64: 32, 2>}, {pipeline_mode = #tpu.pipeline_mode<synchronous>, transform_indices = @transform_3, window_bounds = array<i64: 4, 49>}, {pipeline_mode = #tpu.pipeline_mode<synchronous>, transform_indices = @transform_4, window_bounds = array<i64: 7, 256>}, {transform_indices = @transform_5, window_bounds = array<i64: 2, 32, 256>}]} {
    %cst = arith.constant 0.000000e+00 : f32
    %0 = vector.broadcast %cst : f32 to vector<4x128xf32>
    %c0 = arith.constant 0 : index
    %c0_0 = arith.constant 0 : index
    %1 = vector.load %arg7[%c0, %c0_0] : memref<4x512xf32, #tpu.memory_space<vmem>>, vector<4x128xf32>
    tpu.vector_store %arg7[%c0, %c0_0], %0 {strides = array<i32>} : memref<4x512xf32, #tpu.memory_space<vmem>>, vector<4x128xf32>,
    %cst_1 = arith.constant 0.000000e+00 : f32
    %2 = vector.broadcast %cst_1 : f32 to vector<4x128xf32>
    %c0_2 = arith.constant 0 : index
    %c384 = arith.constant 384 : index
    %3 = vector.load %arg7[%c0_2, %c384] : memref<4x512xf32, #tpu.memory_space<vmem>>, vector<4x128xf32>
    tpu.vector_store %arg7[%c0_2, %c384], %2 {strides = array<i32>} : memref<4x512xf32, #tpu.memory_space<vmem>>, vector<4x128xf32>,
    %c0_3 = arith.constant 0 : index
    %c0_4 = arith.constant 0 : index
    %c0_5 = arith.constant 0 : index
    %4 = vector.load %arg1[%c0_3, %c0_4, %c0_5] : memref<2x32x256xf32, #tpu.memory_space<vmem>>, vector<1x32x256xf32>
    %5 = vector.shape_cast %4 : vector<1x32x256xf32> to vector<32x256xf32>
    %cst_6 = arith.constant dense<0xFF800000> : vector<32xf32>
    %6 = vector.multi_reduction <maximumf>, %5, %cst_6 [1] : vector<32x256xf32> to vector<32xf32>
    %7 = vector.shape_cast %6 : vector<32xf32> to vector<32x1xf32>
    %cst_7 = arith.constant dense<0.000000e+00> : vector<32xf32>
    %8 = vector.multi_reduction <add>, %5, %cst_7 [1] : vector<32x256xf32> to vector<32xf32>
    %9 = vector.shape_cast %8 : vector<32xf32> to vector<32x1xf32>
    %cst_8 = arith.constant 3.906250e-03 : f32
    %10 = vector.broadcast %cst_8 : f32 to vector<32x1xf32>
    %11 = arith.mulf %9, %10 : vector<32x1xf32>
    %12 = tpu.iota {dimensions = array<i32: 1>} : vector<32x2xi32>
    %c0_i32 = arith.constant 0 : i32
    %13 = vector.broadcast %c0_i32 : i32 to vector<32x2xi32>
    %14 = arith.cmpi eq, %12, %13 : vector<32x2xi32>
    %15 = vector.shape_cast %7 : vector<32x1xf32> to vector<32x1xf32>
    %16 = vector.broadcast %15 : vector<32x1xf32> to vector<32x2xf32>
    %17 = vector.shape_cast %11 : vector<32x1xf32> to vector<32x1xf32>
    %18 = vector.broadcast %17 : vector<32x1xf32> to vector<32x2xf32>
    %19 = arith.select %14, %16, %18 : vector<32x2xi1>, vector<32x2xf32>
    %cst_9 = arith.constant 0.000000e+00 : f32
    %20 = vector.broadcast %cst_9 : f32 to vector<32x1xf32>
    %c0_10 = arith.constant 0 : index
    %c0_11 = arith.constant 0 : index
    %21 = vector.load %arg2[%c0_10, %c0_11] : memref<32x2xf32, #tpu.memory_space<vmem>>, vector<32x1xf32>
    %22 = vector.broadcast %21 : vector<32x1xf32> to vector<32x2xf32>
    %23 = arith.mulf %22, %19 : vector<32x2xf32>
    %cst_12 = arith.constant dense<0.000000e+00> : vector<2xf32>
    %24 = vector.multi_reduction <add>, %23, %cst_12 [0] : vector<32x2xf32> to vector<2xf32>
    %25 = vector.shape_cast %24 : vector<2xf32> to vector<1x2xf32>
    %cst_13 = arith.constant 0.000000e+00 : f32
    %26 = vector.broadcast %cst_13 : f32 to vector<1x2xf32>
    %27 = arith.maximumf %25, %26 : vector<1x2xf32>
    %cst_14 = arith.constant dense<0.000000e+00> : vector<1xf32>
    %28 = vector.multi_reduction <add>, %27, %cst_14 [1] : vector<1x2xf32> to vector<1xf32>
    %29 = vector.shape_cast %28 : vector<1xf32> to vector<1x1xf32>
    %c0_15 = arith.constant 0 : index
    %c0_16 = arith.constant 0 : index
    %30 = vector.load %arg3[%c0_15, %c0_16] : memref<32x2xf32, #tpu.memory_space<vmem>>, vector<32x1xf32>
    %31 = vector.broadcast %29 : vector<1x1xf32> to vector<32x1xf32>
    %32 = arith.mulf %30, %31 : vector<32x1xf32>
    %33 = arith.addf %20, %32 : vector<32x1xf32>
    %c0_17 = arith.constant 0 : index
    %c1 = arith.constant 1 : index
    %34 = vector.load %arg2[%c0_17, %c1] : memref<32x2xf32, #tpu.memory_space<vmem>>, vector<32x1xf32>
    %35 = vector.broadcast %34 : vector<32x1xf32> to vector<32x2xf32>
    %36 = arith.mulf %35, %19 : vector<32x2xf32>
    %cst_18 = arith.constant dense<0.000000e+00> : vector<2xf32>
    %37 = vector.multi_reduction <add>, %36, %cst_18 [0] : vector<32x2xf32> to vector<2xf32>
    %38 = vector.shape_cast %37 : vector<2xf32> to vector<1x2xf32>
    %cst_19 = arith.constant 0.000000e+00 : f32
    %39 = vector.broadcast %cst_19 : f32 to vector<1x2xf32>
    %40 = arith.maximumf %38, %39 : vector<1x2xf32>
    %cst_20 = arith.constant dense<0.000000e+00> : vector<1xf32>
    %41 = vector.multi_reduction <add>, %40, %cst_20 [1] : vector<1x2xf32> to vector<1xf32>
    %42 = vector.shape_cast %41 : vector<1xf32> to vector<1x1xf32>
    %c0_21 = arith.constant 0 : index
    %c1_22 = arith.constant 1 : index
    %43 = vector.load %arg3[%c0_21, %c1_22] : memref<32x2xf32, #tpu.memory_space<vmem>>, vector<32x1xf32>
    %44 = vector.broadcast %42 : vector<1x1xf32> to vector<32x1xf32>
    %45 = arith.mulf %43, %44 : vector<32x1xf32>
    %46 = arith.addf %33, %45 : vector<32x1xf32>
    %47 = arith.negf %46 : vector<32x1xf32>
    %48 = math.exp %47 : vector<32x1xf32>
    %cst_23 = arith.constant 1.000000e+00 : f32
    %49 = vector.broadcast %cst_23 : f32 to vector<32x1xf32>
    %50 = arith.addf %49, %48 : vector<32x1xf32>
    %51 = arith.divf %49, %50 : vector<32x1xf32>
    %52 = vector.broadcast %51 : vector<32x1xf32> to vector<32x256xf32>
    %53 = arith.mulf %5, %52 : vector<32x256xf32>
    %cst_24 = arith.constant dense<0xFF800000> : vector<256xf32>
    %54 = vector.multi_reduction <maximumf>, %53, %cst_24 [0] : vector<32x256xf32> to vector<256xf32>
    %55 = vector.shape_cast %54 : vector<256xf32> to vector<1x256xf32>
    %cst_25 = arith.constant dense<0.000000e+00> : vector<256xf32>
    %56 = vector.multi_reduction <add>, %53, %cst_25 [0] : vector<32x256xf32> to vector<256xf32>
    %57 = vector.shape_cast %56 : vector<256xf32> to vector<1x256xf32>
    %cst_26 = arith.constant 3.125000e-02 : f32
    %58 = vector.broadcast %cst_26 : f32 to vector<1x256xf32>
    %59 = arith.mulf %57, %58 : vector<1x256xf32>
    %c0_27 = arith.constant 0 : index
    %c128 = arith.constant 128 : index
    %60 = vector.load %arg7[%c0_27, %c128] : memref<4x512xf32, #tpu.memory_space<vmem>>, vector<1x256xf32>
    tpu.vector_store %arg7[%c0_27, %c128], %55 {strides = array<i32>} : memref<4x512xf32, #tpu.memory_space<vmem>>, vector<1x256xf32>,
    %c2 = arith.constant 2 : index
    %c128_28 = arith.constant 128 : index
    %61 = vector.load %arg7[%c2, %c128_28] : memref<4x512xf32, #tpu.memory_space<vmem>>, vector<1x256xf32>
    tpu.vector_store %arg7[%c2, %c128_28], %59 {strides = array<i32>} : memref<4x512xf32, #tpu.memory_space<vmem>>, vector<1x256xf32>,
    %c1_29 = arith.constant 1 : index
    %c0_30 = arith.constant 0 : index
    %c0_31 = arith.constant 0 : index
    %62 = vector.load %arg1[%c1_29, %c0_30, %c0_31] : memref<2x32x256xf32, #tpu.memory_space<vmem>>, vector<1x32x256xf32>
    %63 = vector.shape_cast %62 : vector<1x32x256xf32> to vector<32x256xf32>
    %cst_32 = arith.constant dense<0xFF800000> : vector<32xf32>
    %64 = vector.multi_reduction <maximumf>, %63, %cst_32 [1] : vector<32x256xf32> to vector<32xf32>
    %65 = vector.shape_cast %64 : vector<32xf32> to vector<32x1xf32>
    %cst_33 = arith.constant dense<0.000000e+00> : vector<32xf32>
    %66 = vector.multi_reduction <add>, %63, %cst_33 [1] : vector<32x256xf32> to vector<32xf32>
    %67 = vector.shape_cast %66 : vector<32xf32> to vector<32x1xf32>
    %cst_34 = arith.constant 3.906250e-03 : f32
    %68 = vector.broadcast %cst_34 : f32 to vector<32x1xf32>
    %69 = arith.mulf %67, %68 : vector<32x1xf32>
    %70 = tpu.iota {dimensions = array<i32: 1>} : vector<32x2xi32>
    %c0_i32_35 = arith.constant 0 : i32
    %71 = vector.broadcast %c0_i32_35 : i32 to vector<32x2xi32>
    %72 = arith.cmpi eq, %70, %71 : vector<32x2xi32>
    %73 = vector.shape_cast %65 : vector<32x1xf32> to vector<32x1xf32>
    %74 = vector.broadcast %73 : vector<32x1xf32> to vector<32x2xf32>
    %75 = vector.shape_cast %69 : vector<32x1xf32> to vector<32x1xf32>
    %76 = vector.broadcast %75 : vector<32x1xf32> to vector<32x2xf32>
    %77 = arith.select %72, %74, %76 : vector<32x2xi1>, vector<32x2xf32>
    %cst_36 = arith.constant 0.000000e+00 : f32
    %78 = vector.broadcast %cst_36 : f32 to vector<32x1xf32>
    %c0_37 = arith.constant 0 : index
    %c0_38 = arith.constant 0 : index
    %79 = vector.load %arg2[%c0_37, %c0_38] : memref<32x2xf32, #tpu.memory_space<vmem>>, vector<32x1xf32>
    %80 = vector.broadcast %79 : vector<32x1xf32> to vector<32x2xf32>
    %81 = arith.mulf %80, %77 : vector<32x2xf32>
    %cst_39 = arith.constant dense<0.000000e+00> : vector<2xf32>
    %82 = vector.multi_reduction <add>, %81, %cst_39 [0] : vector<32x2xf32> to vector<2xf32>
    %83 = vector.shape_cast %82 : vector<2xf32> to vector<1x2xf32>
    %cst_40 = arith.constant 0.000000e+00 : f32
    %84 = vector.broadcast %cst_40 : f32 to vector<1x2xf32>
    %85 = arith.maximumf %83, %84 : vector<1x2xf32>
    %cst_41 = arith.constant dense<0.000000e+00> : vector<1xf32>
    %86 = vector.multi_reduction <add>, %85, %cst_41 [1] : vector<1x2xf32> to vector<1xf32>
    %87 = vector.shape_cast %86 : vector<1xf32> to vector<1x1xf32>
    %c0_42 = arith.constant 0 : index
    %c0_43 = arith.constant 0 : index
    %88 = vector.load %arg3[%c0_42, %c0_43] : memref<32x2xf32, #tpu.memory_space<vmem>>, vector<32x1xf32>
    %89 = vector.broadcast %87 : vector<1x1xf32> to vector<32x1xf32>
    %90 = arith.mulf %88, %89 : vector<32x1xf32>
    %91 = arith.addf %78, %90 : vector<32x1xf32>
    %c0_44 = arith.constant 0 : index
    %c1_45 = arith.constant 1 : index
    %92 = vector.load %arg2[%c0_44, %c1_45] : memref<32x2xf32, #tpu.memory_space<vmem>>, vector<32x1xf32>
    %93 = vector.broadcast %92 : vector<32x1xf32> to vector<32x2xf32>
    %94 = arith.mulf %93, %77 : vector<32x2xf32>
    %cst_46 = arith.constant dense<0.000000e+00> : vector<2xf32>
    %95 = vector.multi_reduction <add>, %94, %cst_46 [0] : vector<32x2xf32> to vector<2xf32>
    %96 = vector.shape_cast %95 : vector<2xf32> to vector<1x2xf32>
    %cst_47 = arith.constant 0.000000e+00 : f32
    %97 = vector.broadcast %cst_47 : f32 to vector<1x2xf32>
    %98 = arith.maximumf %96, %97 : vector<1x2xf32>
    %cst_48 = arith.constant dense<0.000000e+00> : vector<1xf32>
    %99 = vector.multi_reduction <add>, %98, %cst_48 [1] : vector<1x2xf32> to vector<1xf32>
    %100 = vector.shape_cast %99 : vector<1xf32> to vector<1x1xf32>
    %c0_49 = arith.constant 0 : index
    %c1_50 = arith.constant 1 : index
    %101 = vector.load %arg3[%c0_49, %c1_50] : memref<32x2xf32, #tpu.memory_space<vmem>>, vector<32x1xf32>
    %102 = vector.broadcast %100 : vector<1x1xf32> to vector<32x1xf32>
    %103 = arith.mulf %101, %102 : vector<32x1xf32>
    %104 = arith.addf %91, %103 : vector<32x1xf32>
    %105 = arith.negf %104 : vector<32x1xf32>
    %106 = math.exp %105 : vector<32x1xf32>
    %cst_51 = arith.constant 1.000000e+00 : f32
    %107 = vector.broadcast %cst_51 : f32 to vector<32x1xf32>
    %108 = arith.addf %107, %106 : vector<32x1xf32>
    %109 = arith.divf %107, %108 : vector<32x1xf32>
    %110 = vector.broadcast %109 : vector<32x1xf32> to vector<32x256xf32>
    %111 = arith.mulf %63, %110 : vector<32x256xf32>
    %cst_52 = arith.constant dense<0xFF800000> : vector<256xf32>
    %112 = vector.multi_reduction <maximumf>, %111, %cst_52 [0] : vector<32x256xf32> to vector<256xf32>
    %113 = vector.shape_cast %112 : vector<256xf32> to vector<1x256xf32>
    %cst_53 = arith.constant dense<0.000000e+00> : vector<256xf32>
    %114 = vector.multi_reduction <add>, %111, %cst_53 [0] : vector<32x256xf32> to vector<256xf32>
    %115 = vector.shape_cast %114 : vector<256xf32> to vector<1x256xf32>
    %cst_54 = arith.constant 3.125000e-02 : f32
    %116 = vector.broadcast %cst_54 : f32 to vector<1x256xf32>
    %117 = arith.mulf %115, %116 : vector<1x256xf32>
    %c1_55 = arith.constant 1 : index
    %c128_56 = arith.constant 128 : index
    %118 = vector.load %arg7[%c1_55, %c128_56] : memref<4x512xf32, #tpu.memory_space<vmem>>, vector<1x256xf32>
    tpu.vector_store %arg7[%c1_55, %c128_56], %113 {strides = array<i32>} : memref<4x512xf32, #tpu.memory_space<vmem>>, vector<1x256xf32>,
    %c3 = arith.constant 3 : index
    %c128_57 = arith.constant 128 : index
    %119 = vector.load %arg7[%c3, %c128_57] : memref<4x512xf32, #tpu.memory_space<vmem>>, vector<1x256xf32>
    tpu.vector_store %arg7[%c3, %c128_57], %117 {strides = array<i32>} : memref<4x512xf32, #tpu.memory_space<vmem>>, vector<1x256xf32>,
    %cst_58 = arith.constant 0.000000e+00 : f32
    %120 = vector.broadcast %cst_58 : f32 to vector<4x256xf32>
    %cst_59 = arith.constant 0.000000e+00 : f32
    %121 = vector.broadcast %cst_59 : f32 to vector<4x256xf32>
    %c0_60 = arith.constant 0 : index
    %c77 = arith.constant 77 : index
    %122 = vector.load %arg7[%c0_60, %c77] : memref<4x512xf32, #tpu.memory_space<vmem>>, vector<4x256xf32>
    %c0_61 = arith.constant 0 : index
    %c0_62 = arith.constant 0 : index
    %123 = vector.load %arg4[%c0_61, %c0_62] : memref<4x49xf32, #tpu.memory_space<vmem>>, vector<4x1xf32>
    %124 = vector.broadcast %123 : vector<4x1xf32> to vector<4x256xf32>
    %125 = arith.mulf %124, %122 : vector<4x256xf32>
    %126 = arith.addf %121, %125 : vector<4x256xf32>
    %c0_63 = arith.constant 0 : index
    %c93 = arith.constant 93 : index
    %127 = vector.load %arg7[%c0_63, %c93] : memref<4x512xf32, #tpu.memory_space<vmem>>, vector<4x256xf32>
    %c0_64 = arith.constant 0 : index
    %c7 = arith.constant 7 : index
    %128 = vector.load %arg4[%c0_64, %c7] : memref<4x49xf32, #tpu.memory_space<vmem>>, vector<4x1xf32>
    %129 = vector.broadcast %128 : vector<4x1xf32> to vector<4x256xf32>
    %130 = arith.mulf %129, %127 : vector<4x256xf32>
    %131 = arith.addf %126, %130 : vector<4x256xf32>
    %c0_65 = arith.constant 0 : index
    %c109 = arith.constant 109 : index
    %132 = vector.load %arg7[%c0_65, %c109] : memref<4x512xf32, #tpu.memory_space<vmem>>, vector<4x256xf32>
    %c0_66 = arith.constant 0 : index
    %c14 = arith.constant 14 : index
    %133 = vector.load %arg4[%c0_66, %c14] : memref<4x49xf32, #tpu.memory_space<vmem>>, vector<4x1xf32>
    %134 = vector.broadcast %133 : vector<4x1xf32> to vector<4x256xf32>
    %135 = arith.mulf %134, %132 : vector<4x256xf32>
    %136 = arith.addf %131, %135 : vector<4x256xf32>
    %c0_67 = arith.constant 0 : index
    %c125 = arith.constant 125 : index
    %137 = vector.load %arg7[%c0_67, %c125] : memref<4x512xf32, #tpu.memory_space<vmem>>, vector<4x256xf32>
    %c0_68 = arith.constant 0 : index
    %c21 = arith.constant 21 : index
    %138 = vector.load %arg4[%c0_68, %c21] : memref<4x49xf32, #tpu.memory_space<vmem>>, vector<4x1xf32>
    %139 = vector.broadcast %138 : vector<4x1xf32> to vector<4x256xf32>
    %140 = arith.mulf %139, %137 : vector<4x256xf32>
    %141 = arith.addf %136, %140 : vector<4x256xf32>
    %c0_69 = arith.constant 0 : index
    %c141 = arith.constant 141 : index
    %142 = vector.load %arg7[%c0_69, %c141] : memref<4x512xf32, #tpu.memory_space<vmem>>, vector<4x256xf32>
    %c0_70 = arith.constant 0 : index
    %c28 = arith.constant 28 : index
    %143 = vector.load %arg4[%c0_70, %c28] : memref<4x49xf32, #tpu.memory_space<vmem>>, vector<4x1xf32>
    %144 = vector.broadcast %143 : vector<4x1xf32> to vector<4x256xf32>
    %145 = arith.mulf %144, %142 : vector<4x256xf32>
    %146 = arith.addf %141, %145 : vector<4x256xf32>
    %c0_71 = arith.constant 0 : index
    %c157 = arith.constant 157 : index
    %147 = vector.load %arg7[%c0_71, %c157] : memref<4x512xf32, #tpu.memory_space<vmem>>, vector<4x256xf32>
    %c0_72 = arith.constant 0 : index
    %c35 = arith.constant 35 : index
    %148 = vector.load %arg4[%c0_72, %c35] : memref<4x49xf32, #tpu.memory_space<vmem>>, vector<4x1xf32>
    %149 = vector.broadcast %148 : vector<4x1xf32> to vector<4x256xf32>
    %150 = arith.mulf %149, %147 : vector<4x256xf32>
    %151 = arith.addf %146, %150 : vector<4x256xf32>
    %c0_73 = arith.constant 0 : index
    %c173 = arith.constant 173 : index
    %152 = vector.load %arg7[%c0_73, %c173] : memref<4x512xf32, #tpu.memory_space<vmem>>, vector<4x256xf32>
    %c0_74 = arith.constant 0 : index
    %c42 = arith.constant 42 : index
    %153 = vector.load %arg4[%c0_74, %c42] : memref<4x49xf32, #tpu.memory_space<vmem>>, vector<4x1xf32>
    %154 = vector.broadcast %153 : vector<4x1xf32> to vector<4x256xf32>
    %155 = arith.mulf %154, %152 : vector<4x256xf32>
    %156 = arith.addf %151, %155 : vector<4x256xf32>
    %c0_75 = arith.constant 0 : index
    %c0_76 = arith.constant 0 : index
    %157 = vector.load %arg5[%c0_75, %c0_76] : memref<7x256xf32, #tpu.memory_space<vmem>>, vector<1x256xf32>
    %158 = vector.broadcast %157 : vector<1x256xf32> to vector<4x256xf32>
    %159 = arith.mulf %156, %158 : vector<4x256xf32>
    %160 = arith.addf %120, %159 : vector<4x256xf32>
    %cst_77 = arith.constant 0.000000e+00 : f32
    %161 = vector.broadcast %cst_77 : f32 to vector<4x256xf32>
    %c0_78 = arith.constant 0 : index
    %c78 = arith.constant 78 : index
    %162 = vector.load %arg7[%c0_78, %c78] : memref<4x512xf32, #tpu.memory_space<vmem>>, vector<4x256xf32>
    %c0_79 = arith.constant 0 : index
    %c1_80 = arith.constant 1 : index
    %163 = vector.load %arg4[%c0_79, %c1_80] : memref<4x49xf32, #tpu.memory_space<vmem>>, vector<4x1xf32>
    %164 = vector.broadcast %163 : vector<4x1xf32> to vector<4x256xf32>
    %165 = arith.mulf %164, %162 : vector<4x256xf32>
    %166 = arith.addf %161, %165 : vector<4x256xf32>
    %c0_81 = arith.constant 0 : index
    %c94 = arith.constant 94 : index
    %167 = vector.load %arg7[%c0_81, %c94] : memref<4x512xf32, #tpu.memory_space<vmem>>, vector<4x256xf32>
    %c0_82 = arith.constant 0 : index
    %c8 = arith.constant 8 : index
    %168 = vector.load %arg4[%c0_82, %c8] : memref<4x49xf32, #tpu.memory_space<vmem>>, vector<4x1xf32>
    %169 = vector.broadcast %168 : vector<4x1xf32> to vector<4x256xf32>
    %170 = arith.mulf %169, %167 : vector<4x256xf32>
    %171 = arith.addf %166, %170 : vector<4x256xf32>
    %c0_83 = arith.constant 0 : index
    %c110 = arith.constant 110 : index
    %172 = vector.load %arg7[%c0_83, %c110] : memref<4x512xf32, #tpu.memory_space<vmem>>, vector<4x256xf32>
    %c0_84 = arith.constant 0 : index
    %c15 = arith.constant 15 : index
    %173 = vector.load %arg4[%c0_84, %c15] : memref<4x49xf32, #tpu.memory_space<vmem>>, vector<4x1xf32>
    %174 = vector.broadcast %173 : vector<4x1xf32> to vector<4x256xf32>
    %175 = arith.mulf %174, %172 : vector<4x256xf32>
    %176 = arith.addf %171, %175 : vector<4x256xf32>
    %c0_85 = arith.constant 0 : index
    %c126 = arith.constant 126 : index
    %177 = vector.load %arg7[%c0_85, %c126] : memref<4x512xf32, #tpu.memory_space<vmem>>, vector<4x256xf32>
    %c0_86 = arith.constant 0 : index
    %c22 = arith.constant 22 : index
    %178 = vector.load %arg4[%c0_86, %c22] : memref<4x49xf32, #tpu.memory_space<vmem>>, vector<4x1xf32>
    %179 = vector.broadcast %178 : vector<4x1xf32> to vector<4x256xf32>
    %180 = arith.mulf %179, %177 : vector<4x256xf32>
    %181 = arith.addf %176, %180 : vector<4x256xf32>
    %c0_87 = arith.constant 0 : index
    %c142 = arith.constant 142 : index
    %182 = vector.load %arg7[%c0_87, %c142] : memref<4x512xf32, #tpu.memory_space<vmem>>, vector<4x256xf32>
    %c0_88 = arith.constant 0 : index
    %c29 = arith.constant 29 : index
    %183 = vector.load %arg4[%c0_88, %c29] : memref<4x49xf32, #tpu.memory_space<vmem>>, vector<4x1xf32>
    %184 = vector.broadcast %183 : vector<4x1xf32> to vector<4x256xf32>
    %185 = arith.mulf %184, %182 : vector<4x256xf32>
    %186 = arith.addf %181, %185 : vector<4x256xf32>
    %c0_89 = arith.constant 0 : index
    %c158 = arith.constant 158 : index
    %187 = vector.load %arg7[%c0_89, %c158] : memref<4x512xf32, #tpu.memory_space<vmem>>, vector<4x256xf32>
    %c0_90 = arith.constant 0 : index
    %c36 = arith.constant 36 : index
    %188 = vector.load %arg4[%c0_90, %c36] : memref<4x49xf32, #tpu.memory_space<vmem>>, vector<4x1xf32>
    %189 = vector.broadcast %188 : vector<4x1xf32> to vector<4x256xf32>
    %190 = arith.mulf %189, %187 : vector<4x256xf32>
    %191 = arith.addf %186, %190 : vector<4x256xf32>
    %c0_91 = arith.constant 0 : index
    %c174 = arith.constant 174 : index
    %192 = vector.load %arg7[%c0_91, %c174] : memref<4x512xf32, #tpu.memory_space<vmem>>, vector<4x256xf32>
    %c0_92 = arith.constant 0 : index
    %c43 = arith.constant 43 : index
    %193 = vector.load %arg4[%c0_92, %c43] : memref<4x49xf32, #tpu.memory_space<vmem>>, vector<4x1xf32>
    %194 = vector.broadcast %193 : vector<4x1xf32> to vector<4x256xf32>
    %195 = arith.mulf %194, %192 : vector<4x256xf32>
    %196 = arith.addf %191, %195 : vector<4x256xf32>
    %c1_93 = arith.constant 1 : index
    %c0_94 = arith.constant 0 : index
    %197 = vector.load %arg5[%c1_93, %c0_94] : memref<7x256xf32, #tpu.memory_space<vmem>>, vector<1x256xf32>
    %198 = vector.broadcast %197 : vector<1x256xf32> to vector<4x256xf32>
    %199 = arith.mulf %196, %198 : vector<4x256xf32>
    %200 = arith.addf %160, %199 : vector<4x256xf32>
    %cst_95 = arith.constant 0.000000e+00 : f32
    %201 = vector.broadcast %cst_95 : f32 to vector<4x256xf32>
    %c0_96 = arith.constant 0 : index
    %c79 = arith.constant 79 : index
    %202 = vector.load %arg7[%c0_96, %c79] : memref<4x512xf32, #tpu.memory_space<vmem>>, vector<4x256xf32>
    %c0_97 = arith.constant 0 : index
    %c2_98 = arith.constant 2 : index
    %203 = vector.load %arg4[%c0_97, %c2_98] : memref<4x49xf32, #tpu.memory_space<vmem>>, vector<4x1xf32>
    %204 = vector.broadcast %203 : vector<4x1xf32> to vector<4x256xf32>
    %205 = arith.mulf %204, %202 : vector<4x256xf32>
    %206 = arith.addf %201, %205 : vector<4x256xf32>
    %c0_99 = arith.constant 0 : index
    %c95 = arith.constant 95 : index
    %207 = vector.load %arg7[%c0_99, %c95] : memref<4x512xf32, #tpu.memory_space<vmem>>, vector<4x256xf32>
    %c0_100 = arith.constant 0 : index
    %c9 = arith.constant 9 : index
    %208 = vector.load %arg4[%c0_100, %c9] : memref<4x49xf32, #tpu.memory_space<vmem>>, vector<4x1xf32>
    %209 = vector.broadcast %208 : vector<4x1xf32> to vector<4x256xf32>
    %210 = arith.mulf %209, %207 : vector<4x256xf32>
    %211 = arith.addf %206, %210 : vector<4x256xf32>
    %c0_101 = arith.constant 0 : index
    %c111 = arith.constant 111 : index
    %212 = vector.load %arg7[%c0_101, %c111] : memref<4x512xf32, #tpu.memory_space<vmem>>, vector<4x256xf32>
    %c0_102 = arith.constant 0 : index
    %c16 = arith.constant 16 : index
    %213 = vector.load %arg4[%c0_102, %c16] : memref<4x49xf32, #tpu.memory_space<vmem>>, vector<4x1xf32>
    %214 = vector.broadcast %213 : vector<4x1xf32> to vector<4x256xf32>
    %215 = arith.mulf %214, %212 : vector<4x256xf32>
    %216 = arith.addf %211, %215 : vector<4x256xf32>
    %c0_103 = arith.constant 0 : index
    %c127 = arith.constant 127 : index
    %217 = vector.load %arg7[%c0_103, %c127] : memref<4x512xf32, #tpu.memory_space<vmem>>, vector<4x256xf32>
    %c0_104 = arith.constant 0 : index
    %c23 = arith.constant 23 : index
    %218 = vector.load %arg4[%c0_104, %c23] : memref<4x49xf32, #tpu.memory_space<vmem>>, vector<4x1xf32>
    %219 = vector.broadcast %218 : vector<4x1xf32> to vector<4x256xf32>
    %220 = arith.mulf %219, %217 : vector<4x256xf32>
    %221 = arith.addf %216, %220 : vector<4x256xf32>
    %c0_105 = arith.constant 0 : index
    %c143 = arith.constant 143 : index
    %222 = vector.load %arg7[%c0_105, %c143] : memref<4x512xf32, #tpu.memory_space<vmem>>, vector<4x256xf32>
    %c0_106 = arith.constant 0 : index
    %c30 = arith.constant 30 : index
    %223 = vector.load %arg4[%c0_106, %c30] : memref<4x49xf32, #tpu.memory_space<vmem>>, vector<4x1xf32>
    %224 = vector.broadcast %223 : vector<4x1xf32> to vector<4x256xf32>
    %225 = arith.mulf %224, %222 : vector<4x256xf32>
    %226 = arith.addf %221, %225 : vector<4x256xf32>
    %c0_107 = arith.constant 0 : index
    %c159 = arith.constant 159 : index
    %227 = vector.load %arg7[%c0_107, %c159] : memref<4x512xf32, #tpu.memory_space<vmem>>, vector<4x256xf32>
    %c0_108 = arith.constant 0 : index
    %c37 = arith.constant 37 : index
    %228 = vector.load %arg4[%c0_108, %c37] : memref<4x49xf32, #tpu.memory_space<vmem>>, vector<4x1xf32>
    %229 = vector.broadcast %228 : vector<4x1xf32> to vector<4x256xf32>
    %230 = arith.mulf %229, %227 : vector<4x256xf32>
    %231 = arith.addf %226, %230 : vector<4x256xf32>
    %c0_109 = arith.constant 0 : index
    %c175 = arith.constant 175 : index
    %232 = vector.load %arg7[%c0_109, %c175] : memref<4x512xf32, #tpu.memory_space<vmem>>, vector<4x256xf32>
    %c0_110 = arith.constant 0 : index
    %c44 = arith.constant 44 : index
    %233 = vector.load %arg4[%c0_110, %c44] : memref<4x49xf32, #tpu.memory_space<vmem>>, vector<4x1xf32>
    %234 = vector.broadcast %233 : vector<4x1xf32> to vector<4x256xf32>
    %235 = arith.mulf %234, %232 : vector<4x256xf32>
    %236 = arith.addf %231, %235 : vector<4x256xf32>
    %c2_111 = arith.constant 2 : index
    %c0_112 = arith.constant 0 : index
    %237 = vector.load %arg5[%c2_111, %c0_112] : memref<7x256xf32, #tpu.memory_space<vmem>>, vector<1x256xf32>
    %238 = vector.broadcast %237 : vector<1x256xf32> to vector<4x256xf32>
    %239 = arith.mulf %236, %238 : vector<4x256xf32>
    %240 = arith.addf %200, %239 : vector<4x256xf32>
    %cst_113 = arith.constant 0.000000e+00 : f32
    %241 = vector.broadcast %cst_113 : f32 to vector<4x256xf32>
    %c0_114 = arith.constant 0 : index
    %c80 = arith.constant 80 : index
    %242 = vector.load %arg7[%c0_114, %c80] : memref<4x512xf32, #tpu.memory_space<vmem>>, vector<4x256xf32>
    %c0_115 = arith.constant 0 : index
    %c3_116 = arith.constant 3 : index
    %243 = vector.load %arg4[%c0_115, %c3_116] : memref<4x49xf32, #tpu.memory_space<vmem>>, vector<4x1xf32>
    %244 = vector.broadcast %243 : vector<4x1xf32> to vector<4x256xf32>
    %245 = arith.mulf %244, %242 : vector<4x256xf32>
    %246 = arith.addf %241, %245 : vector<4x256xf32>
    %c0_117 = arith.constant 0 : index
    %c96 = arith.constant 96 : index
    %247 = vector.load %arg7[%c0_117, %c96] : memref<4x512xf32, #tpu.memory_space<vmem>>, vector<4x256xf32>
    %c0_118 = arith.constant 0 : index
    %c10 = arith.constant 10 : index
    %248 = vector.load %arg4[%c0_118, %c10] : memref<4x49xf32, #tpu.memory_space<vmem>>, vector<4x1xf32>
    %249 = vector.broadcast %248 : vector<4x1xf32> to vector<4x256xf32>
    %250 = arith.mulf %249, %247 : vector<4x256xf32>
    %251 = arith.addf %246, %250 : vector<4x256xf32>
    %c0_119 = arith.constant 0 : index
    %c112 = arith.constant 112 : index
    %252 = vector.load %arg7[%c0_119, %c112] : memref<4x512xf32, #tpu.memory_space<vmem>>, vector<4x256xf32>
    %c0_120 = arith.constant 0 : index
    %c17 = arith.constant 17 : index
    %253 = vector.load %arg4[%c0_120, %c17] : memref<4x49xf32, #tpu.memory_space<vmem>>, vector<4x1xf32>
    %254 = vector.broadcast %253 : vector<4x1xf32> to vector<4x256xf32>
    %255 = arith.mulf %254, %252 : vector<4x256xf32>
    %256 = arith.addf %251, %255 : vector<4x256xf32>
    %c0_121 = arith.constant 0 : index
    %c128_122 = arith.constant 128 : index
    %257 = vector.load %arg7[%c0_121, %c128_122] : memref<4x512xf32, #tpu.memory_space<vmem>>, vector<4x256xf32>
    %c0_123 = arith.constant 0 : index
    %c24 = arith.constant 24 : index
    %258 = vector.load %arg4[%c0_123, %c24] : memref<4x49xf32, #tpu.memory_space<vmem>>, vector<4x1xf32>
    %259 = vector.broadcast %258 : vector<4x1xf32> to vector<4x256xf32>
    %260 = arith.mulf %259, %257 : vector<4x256xf32>
    %261 = arith.addf %256, %260 : vector<4x256xf32>
    %c0_124 = arith.constant 0 : index
    %c144 = arith.constant 144 : index
    %262 = vector.load %arg7[%c0_124, %c144] : memref<4x512xf32, #tpu.memory_space<vmem>>, vector<4x256xf32>
    %c0_125 = arith.constant 0 : index
    %c31 = arith.constant 31 : index
    %263 = vector.load %arg4[%c0_125, %c31] : memref<4x49xf32, #tpu.memory_space<vmem>>, vector<4x1xf32>
    %264 = vector.broadcast %263 : vector<4x1xf32> to vector<4x256xf32>
    %265 = arith.mulf %264, %262 : vector<4x256xf32>
    %266 = arith.addf %261, %265 : vector<4x256xf32>
    %c0_126 = arith.constant 0 : index
    %c160 = arith.constant 160 : index
    %267 = vector.load %arg7[%c0_126, %c160] : memref<4x512xf32, #tpu.memory_space<vmem>>, vector<4x256xf32>
    %c0_127 = arith.constant 0 : index
    %c38 = arith.constant 38 : index
    %268 = vector.load %arg4[%c0_127, %c38] : memref<4x49xf32, #tpu.memory_space<vmem>>, vector<4x1xf32>
    %269 = vector.broadcast %268 : vector<4x1xf32> to vector<4x256xf32>
    %270 = arith.mulf %269, %267 : vector<4x256xf32>
    %271 = arith.addf %266, %270 : vector<4x256xf32>
    %c0_128 = arith.constant 0 : index
    %c176 = arith.constant 176 : index
    %272 = vector.load %arg7[%c0_128, %c176] : memref<4x512xf32, #tpu.memory_space<vmem>>, vector<4x256xf32>
    %c0_129 = arith.constant 0 : index
    %c45 = arith.constant 45 : index
    %273 = vector.load %arg4[%c0_129, %c45] : memref<4x49xf32, #tpu.memory_space<vmem>>, vector<4x1xf32>
    %274 = vector.broadcast %273 : vector<4x1xf32> to vector<4x256xf32>
    %275 = arith.mulf %274, %272 : vector<4x256xf32>
    %276 = arith.addf %271, %275 : vector<4x256xf32>
    %c3_130 = arith.constant 3 : index
    %c0_131 = arith.constant 0 : index
    %277 = vector.load %arg5[%c3_130, %c0_131] : memref<7x256xf32, #tpu.memory_space<vmem>>, vector<1x256xf32>
    %278 = vector.broadcast %277 : vector<1x256xf32> to vector<4x256xf32>
    %279 = arith.mulf %276, %278 : vector<4x256xf32>
    %280 = arith.addf %240, %279 : vector<4x256xf32>
    %cst_132 = arith.constant 0.000000e+00 : f32
    %281 = vector.broadcast %cst_132 : f32 to vector<4x256xf32>
    %c0_133 = arith.constant 0 : index
    %c81 = arith.constant 81 : index
    %282 = vector.load %arg7[%c0_133, %c81] : memref<4x512xf32, #tpu.memory_space<vmem>>, vector<4x256xf32>
    %c0_134 = arith.constant 0 : index
    %c4 = arith.constant 4 : index
    %283 = vector.load %arg4[%c0_134, %c4] : memref<4x49xf32, #tpu.memory_space<vmem>>, vector<4x1xf32>
    %284 = vector.broadcast %283 : vector<4x1xf32> to vector<4x256xf32>
    %285 = arith.mulf %284, %282 : vector<4x256xf32>
    %286 = arith.addf %281, %285 : vector<4x256xf32>
    %c0_135 = arith.constant 0 : index
    %c97 = arith.constant 97 : index
    %287 = vector.load %arg7[%c0_135, %c97] : memref<4x512xf32, #tpu.memory_space<vmem>>, vector<4x256xf32>
    %c0_136 = arith.constant 0 : index
    %c11 = arith.constant 11 : index
    %288 = vector.load %arg4[%c0_136, %c11] : memref<4x49xf32, #tpu.memory_space<vmem>>, vector<4x1xf32>
    %289 = vector.broadcast %288 : vector<4x1xf32> to vector<4x256xf32>
    %290 = arith.mulf %289, %287 : vector<4x256xf32>
    %291 = arith.addf %286, %290 : vector<4x256xf32>
    %c0_137 = arith.constant 0 : index
    %c113 = arith.constant 113 : index
    %292 = vector.load %arg7[%c0_137, %c113] : memref<4x512xf32, #tpu.memory_space<vmem>>, vector<4x256xf32>
    %c0_138 = arith.constant 0 : index
    %c18 = arith.constant 18 : index
    %293 = vector.load %arg4[%c0_138, %c18] : memref<4x49xf32, #tpu.memory_space<vmem>>, vector<4x1xf32>
    %294 = vector.broadcast %293 : vector<4x1xf32> to vector<4x256xf32>
    %295 = arith.mulf %294, %292 : vector<4x256xf32>
    %296 = arith.addf %291, %295 : vector<4x256xf32>
    %c0_139 = arith.constant 0 : index
    %c129 = arith.constant 129 : index
    %297 = vector.load %arg7[%c0_139, %c129] : memref<4x512xf32, #tpu.memory_space<vmem>>, vector<4x256xf32>
    %c0_140 = arith.constant 0 : index
    %c25 = arith.constant 25 : index
    %298 = vector.load %arg4[%c0_140, %c25] : memref<4x49xf32, #tpu.memory_space<vmem>>, vector<4x1xf32>
    %299 = vector.broadcast %298 : vector<4x1xf32> to vector<4x256xf32>
    %300 = arith.mulf %299, %297 : vector<4x256xf32>
    %301 = arith.addf %296, %300 : vector<4x256xf32>
    %c0_141 = arith.constant 0 : index
    %c145 = arith.constant 145 : index
    %302 = vector.load %arg7[%c0_141, %c145] : memref<4x512xf32, #tpu.memory_space<vmem>>, vector<4x256xf32>
    %c0_142 = arith.constant 0 : index
    %c32 = arith.constant 32 : index
    %303 = vector.load %arg4[%c0_142, %c32] : memref<4x49xf32, #tpu.memory_space<vmem>>, vector<4x1xf32>
    %304 = vector.broadcast %303 : vector<4x1xf32> to vector<4x256xf32>
    %305 = arith.mulf %304, %302 : vector<4x256xf32>
    %306 = arith.addf %301, %305 : vector<4x256xf32>
    %c0_143 = arith.constant 0 : index
    %c161 = arith.constant 161 : index
    %307 = vector.load %arg7[%c0_143, %c161] : memref<4x512xf32, #tpu.memory_space<vmem>>, vector<4x256xf32>
    %c0_144 = arith.constant 0 : index
    %c39 = arith.constant 39 : index
    %308 = vector.load %arg4[%c0_144, %c39] : memref<4x49xf32, #tpu.memory_space<vmem>>, vector<4x1xf32>
    %309 = vector.broadcast %308 : vector<4x1xf32> to vector<4x256xf32>
    %310 = arith.mulf %309, %307 : vector<4x256xf32>
    %311 = arith.addf %306, %310 : vector<4x256xf32>
    %c0_145 = arith.constant 0 : index
    %c177 = arith.constant 177 : index
    %312 = vector.load %arg7[%c0_145, %c177] : memref<4x512xf32, #tpu.memory_space<vmem>>, vector<4x256xf32>
    %c0_146 = arith.constant 0 : index
    %c46 = arith.constant 46 : index
    %313 = vector.load %arg4[%c0_146, %c46] : memref<4x49xf32, #tpu.memory_space<vmem>>, vector<4x1xf32>
    %314 = vector.broadcast %313 : vector<4x1xf32> to vector<4x256xf32>
    %315 = arith.mulf %314, %312 : vector<4x256xf32>
    %316 = arith.addf %311, %315 : vector<4x256xf32>
    %c4_147 = arith.constant 4 : index
    %c0_148 = arith.constant 0 : index
    %317 = vector.load %arg5[%c4_147, %c0_148] : memref<7x256xf32, #tpu.memory_space<vmem>>, vector<1x256xf32>
    %318 = vector.broadcast %317 : vector<1x256xf32> to vector<4x256xf32>
    %319 = arith.mulf %316, %318 : vector<4x256xf32>
    %320 = arith.addf %280, %319 : vector<4x256xf32>
    %cst_149 = arith.constant 0.000000e+00 : f32
    %321 = vector.broadcast %cst_149 : f32 to vector<4x256xf32>
    %c0_150 = arith.constant 0 : index
    %c82 = arith.constant 82 : index
    %322 = vector.load %arg7[%c0_150, %c82] : memref<4x512xf32, #tpu.memory_space<vmem>>, vector<4x256xf32>
    %c0_151 = arith.constant 0 : index
    %c5 = arith.constant 5 : index
    %323 = vector.load %arg4[%c0_151, %c5] : memref<4x49xf32, #tpu.memory_space<vmem>>, vector<4x1xf32>
    %324 = vector.broadcast %323 : vector<4x1xf32> to vector<4x256xf32>
    %325 = arith.mulf %324, %322 : vector<4x256xf32>
    %326 = arith.addf %321, %325 : vector<4x256xf32>
    %c0_152 = arith.constant 0 : index
    %c98 = arith.constant 98 : index
    %327 = vector.load %arg7[%c0_152, %c98] : memref<4x512xf32, #tpu.memory_space<vmem>>, vector<4x256xf32>
    %c0_153 = arith.constant 0 : index
    %c12 = arith.constant 12 : index
    %328 = vector.load %arg4[%c0_153, %c12] : memref<4x49xf32, #tpu.memory_space<vmem>>, vector<4x1xf32>
    %329 = vector.broadcast %328 : vector<4x1xf32> to vector<4x256xf32>
    %330 = arith.mulf %329, %327 : vector<4x256xf32>
    %331 = arith.addf %326, %330 : vector<4x256xf32>
    %c0_154 = arith.constant 0 : index
    %c114 = arith.constant 114 : index
    %332 = vector.load %arg7[%c0_154, %c114] : memref<4x512xf32, #tpu.memory_space<vmem>>, vector<4x256xf32>
    %c0_155 = arith.constant 0 : index
    %c19 = arith.constant 19 : index
    %333 = vector.load %arg4[%c0_155, %c19] : memref<4x49xf32, #tpu.memory_space<vmem>>, vector<4x1xf32>
    %334 = vector.broadcast %333 : vector<4x1xf32> to vector<4x256xf32>
    %335 = arith.mulf %334, %332 : vector<4x256xf32>
    %336 = arith.addf %331, %335 : vector<4x256xf32>
    %c0_156 = arith.constant 0 : index
    %c130 = arith.constant 130 : index
    %337 = vector.load %arg7[%c0_156, %c130] : memref<4x512xf32, #tpu.memory_space<vmem>>, vector<4x256xf32>
    %c0_157 = arith.constant 0 : index
    %c26 = arith.constant 26 : index
    %338 = vector.load %arg4[%c0_157, %c26] : memref<4x49xf32, #tpu.memory_space<vmem>>, vector<4x1xf32>
    %339 = vector.broadcast %338 : vector<4x1xf32> to vector<4x256xf32>
    %340 = arith.mulf %339, %337 : vector<4x256xf32>
    %341 = arith.addf %336, %340 : vector<4x256xf32>
    %c0_158 = arith.constant 0 : index
    %c146 = arith.constant 146 : index
    %342 = vector.load %arg7[%c0_158, %c146] : memref<4x512xf32, #tpu.memory_space<vmem>>, vector<4x256xf32>
    %c0_159 = arith.constant 0 : index
    %c33 = arith.constant 33 : index
    %343 = vector.load %arg4[%c0_159, %c33] : memref<4x49xf32, #tpu.memory_space<vmem>>, vector<4x1xf32>
    %344 = vector.broadcast %343 : vector<4x1xf32> to vector<4x256xf32>
    %345 = arith.mulf %344, %342 : vector<4x256xf32>
    %346 = arith.addf %341, %345 : vector<4x256xf32>
    %c0_160 = arith.constant 0 : index
    %c162 = arith.constant 162 : index
    %347 = vector.load %arg7[%c0_160, %c162] : memref<4x512xf32, #tpu.memory_space<vmem>>, vector<4x256xf32>
    %c0_161 = arith.constant 0 : index
    %c40 = arith.constant 40 : index
    %348 = vector.load %arg4[%c0_161, %c40] : memref<4x49xf32, #tpu.memory_space<vmem>>, vector<4x1xf32>
    %349 = vector.broadcast %348 : vector<4x1xf32> to vector<4x256xf32>
    %350 = arith.mulf %349, %347 : vector<4x256xf32>
    %351 = arith.addf %346, %350 : vector<4x256xf32>
    %c0_162 = arith.constant 0 : index
    %c178 = arith.constant 178 : index
    %352 = vector.load %arg7[%c0_162, %c178] : memref<4x512xf32, #tpu.memory_space<vmem>>, vector<4x256xf32>
    %c0_163 = arith.constant 0 : index
    %c47 = arith.constant 47 : index
    %353 = vector.load %arg4[%c0_163, %c47] : memref<4x49xf32, #tpu.memory_space<vmem>>, vector<4x1xf32>
    %354 = vector.broadcast %353 : vector<4x1xf32> to vector<4x256xf32>
    %355 = arith.mulf %354, %352 : vector<4x256xf32>
    %356 = arith.addf %351, %355 : vector<4x256xf32>
    %c5_164 = arith.constant 5 : index
    %c0_165 = arith.constant 0 : index
    %357 = vector.load %arg5[%c5_164, %c0_165] : memref<7x256xf32, #tpu.memory_space<vmem>>, vector<1x256xf32>
    %358 = vector.broadcast %357 : vector<1x256xf32> to vector<4x256xf32>
    %359 = arith.mulf %356, %358 : vector<4x256xf32>
    %360 = arith.addf %320, %359 : vector<4x256xf32>
    %cst_166 = arith.constant 0.000000e+00 : f32
    %361 = vector.broadcast %cst_166 : f32 to vector<4x256xf32>
    %c0_167 = arith.constant 0 : index
    %c83 = arith.constant 83 : index
    %362 = vector.load %arg7[%c0_167, %c83] : memref<4x512xf32, #tpu.memory_space<vmem>>, vector<4x256xf32>
    %c0_168 = arith.constant 0 : index
    %c6 = arith.constant 6 : index
    %363 = vector.load %arg4[%c0_168, %c6] : memref<4x49xf32, #tpu.memory_space<vmem>>, vector<4x1xf32>
    %364 = vector.broadcast %363 : vector<4x1xf32> to vector<4x256xf32>
    %365 = arith.mulf %364, %362 : vector<4x256xf32>
    %366 = arith.addf %361, %365 : vector<4x256xf32>
    %c0_169 = arith.constant 0 : index
    %c99 = arith.constant 99 : index
    %367 = vector.load %arg7[%c0_169, %c99] : memref<4x512xf32, #tpu.memory_space<vmem>>, vector<4x256xf32>
    %c0_170 = arith.constant 0 : index
    %c13 = arith.constant 13 : index
    %368 = vector.load %arg4[%c0_170, %c13] : memref<4x49xf32, #tpu.memory_space<vmem>>, vector<4x1xf32>
    %369 = vector.broadcast %368 : vector<4x1xf32> to vector<4x256xf32>
    %370 = arith.mulf %369, %367 : vector<4x256xf32>
    %371 = arith.addf %366, %370 : vector<4x256xf32>
    %c0_171 = arith.constant 0 : index
    %c115 = arith.constant 115 : index
    %372 = vector.load %arg7[%c0_171, %c115] : memref<4x512xf32, #tpu.memory_space<vmem>>, vector<4x256xf32>
    %c0_172 = arith.constant 0 : index
    %c20 = arith.constant 20 : index
    %373 = vector.load %arg4[%c0_172, %c20] : memref<4x49xf32, #tpu.memory_space<vmem>>, vector<4x1xf32>
    %374 = vector.broadcast %373 : vector<4x1xf32> to vector<4x256xf32>
    %375 = arith.mulf %374, %372 : vector<4x256xf32>
    %376 = arith.addf %371, %375 : vector<4x256xf32>
    %c0_173 = arith.constant 0 : index
    %c131 = arith.constant 131 : index
    %377 = vector.load %arg7[%c0_173, %c131] : memref<4x512xf32, #tpu.memory_space<vmem>>, vector<4x256xf32>
    %c0_174 = arith.constant 0 : index
    %c27 = arith.constant 27 : index
    %378 = vector.load %arg4[%c0_174, %c27] : memref<4x49xf32, #tpu.memory_space<vmem>>, vector<4x1xf32>
    %379 = vector.broadcast %378 : vector<4x1xf32> to vector<4x256xf32>
    %380 = arith.mulf %379, %377 : vector<4x256xf32>
    %381 = arith.addf %376, %380 : vector<4x256xf32>
    %c0_175 = arith.constant 0 : index
    %c147 = arith.constant 147 : index
    %382 = vector.load %arg7[%c0_175, %c147] : memref<4x512xf32, #tpu.memory_space<vmem>>, vector<4x256xf32>
    %c0_176 = arith.constant 0 : index
    %c34 = arith.constant 34 : index
    %383 = vector.load %arg4[%c0_176, %c34] : memref<4x49xf32, #tpu.memory_space<vmem>>, vector<4x1xf32>
    %384 = vector.broadcast %383 : vector<4x1xf32> to vector<4x256xf32>
    %385 = arith.mulf %384, %382 : vector<4x256xf32>
    %386 = arith.addf %381, %385 : vector<4x256xf32>
    %c0_177 = arith.constant 0 : index
    %c163 = arith.constant 163 : index
    %387 = vector.load %arg7[%c0_177, %c163] : memref<4x512xf32, #tpu.memory_space<vmem>>, vector<4x256xf32>
    %c0_178 = arith.constant 0 : index
    %c41 = arith.constant 41 : index
    %388 = vector.load %arg4[%c0_178, %c41] : memref<4x49xf32, #tpu.memory_space<vmem>>, vector<4x1xf32>
    %389 = vector.broadcast %388 : vector<4x1xf32> to vector<4x256xf32>
    %390 = arith.mulf %389, %387 : vector<4x256xf32>
    %391 = arith.addf %386, %390 : vector<4x256xf32>
    %c0_179 = arith.constant 0 : index
    %c179 = arith.constant 179 : index
    %392 = vector.load %arg7[%c0_179, %c179] : memref<4x512xf32, #tpu.memory_space<vmem>>, vector<4x256xf32>
    %c0_180 = arith.constant 0 : index
    %c48 = arith.constant 48 : index
    %393 = vector.load %arg4[%c0_180, %c48] : memref<4x49xf32, #tpu.memory_space<vmem>>, vector<4x1xf32>
    %394 = vector.broadcast %393 : vector<4x1xf32> to vector<4x256xf32>
    %395 = arith.mulf %394, %392 : vector<4x256xf32>
    %396 = arith.addf %391, %395 : vector<4x256xf32>
    %c6_181 = arith.constant 6 : index
    %c0_182 = arith.constant 0 : index
    %397 = vector.load %arg5[%c6_181, %c0_182] : memref<7x256xf32, #tpu.memory_space<vmem>>, vector<1x256xf32>
    %398 = vector.broadcast %397 : vector<1x256xf32> to vector<4x256xf32>
    %399 = arith.mulf %396, %398 : vector<4x256xf32>
    %400 = arith.addf %360, %399 : vector<4x256xf32>
    %401 = vector.extract_strided_slice %400 {offsets = [0, 0], sizes = [1, 256], strides = [1, 1]} : vector<4x256xf32> to vector<1x256xf32>
    %402 = vector.extract_strided_slice %400 {offsets = [2, 0], sizes = [1, 256], strides = [1, 1]} : vector<4x256xf32> to vector<1x256xf32>
    %403 = arith.addf %401, %402 : vector<1x256xf32>
    %404 = arith.negf %403 : vector<1x256xf32>
    %405 = math.exp %404 : vector<1x256xf32>
    %cst_183 = arith.constant 1.000000e+00 : f32
    %406 = vector.broadcast %cst_183 : f32 to vector<1x256xf32>
    %407 = arith.addf %406, %405 : vector<1x256xf32>
    %408 = arith.divf %406, %407 : vector<1x256xf32>
    %409 = vector.broadcast %408 : vector<1x256xf32> to vector<32x256xf32>
    %410 = arith.mulf %53, %409 : vector<32x256xf32>
    %c0_184 = arith.constant 0 : index
    %c0_185 = arith.constant 0 : index
    %c0_186 = arith.constant 0 : index
    %411 = vector.load %arg6[%c0_184, %c0_185, %c0_186] : memref<2x32x256xf32, #tpu.memory_space<vmem>>, vector<1x32x256xf32>
    %412 = vector.shape_cast %411 : vector<1x32x256xf32> to vector<32x256xf32>
    %413 = vector.shape_cast %410 : vector<32x256xf32> to vector<1x32x256xf32>
    tpu.vector_store %arg6[%c0_184, %c0_185, %c0_186], %413 {strides = array<i32>} : memref<2x32x256xf32, #tpu.memory_space<vmem>>, vector<1x32x256xf32>,
    %414 = vector.extract_strided_slice %400 {offsets = [1, 0], sizes = [1, 256], strides = [1, 1]} : vector<4x256xf32> to vector<1x256xf32>
    %415 = vector.extract_strided_slice %400 {offsets = [3, 0], sizes = [1, 256], strides = [1, 1]} : vector<4x256xf32> to vector<1x256xf32>
    %416 = arith.addf %414, %415 : vector<1x256xf32>
    %417 = arith.negf %416 : vector<1x256xf32>
    %418 = math.exp %417 : vector<1x256xf32>
    %cst_187 = arith.constant 1.000000e+00 : f32
    %419 = vector.broadcast %cst_187 : f32 to vector<1x256xf32>
    %420 = arith.addf %419, %418 : vector<1x256xf32>
    %421 = arith.divf %419, %420 : vector<1x256xf32>
    %422 = vector.broadcast %421 : vector<1x256xf32> to vector<32x256xf32>
    %423 = arith.mulf %111, %422 : vector<32x256xf32>
    %c1_188 = arith.constant 1 : index
    %c0_189 = arith.constant 0 : index
    %c0_190 = arith.constant 0 : index
    %424 = vector.load %arg6[%c1_188, %c0_189, %c0_190] : memref<2x32x256xf32, #tpu.memory_space<vmem>>, vector<1x32x256xf32>
    %425 = vector.shape_cast %424 : vector<1x32x256xf32> to vector<32x256xf32>
    %426 = vector.shape_cast %423 : vector<32x256xf32> to vector<1x32x256xf32>
    tpu.vector_store %arg6[%c1_188, %c0_189, %c0_190], %426 {strides = array<i32>} : memref<2x32x256xf32, #tpu.memory_space<vmem>>, vector<1x32x256xf32>,
    return
  }
  func.func @transform_0(%arg0: i32) -> (i32, i32, i32) {
    %c0_i32 = arith.constant 0 : i32
    %c0_i32_0 = arith.constant 0 : i32
    %c0_i32_1 = arith.constant 0 : i32
    return %arg0, %c0_i32, %c0_i32_0 : i32, i32, i32
  }
  func.func @transform_1(%arg0: i32) -> (i32, i32) {
    %c0_i32 = arith.constant 0 : i32
    %c0_i32_0 = arith.constant 0 : i32
    %c0_i32_1 = arith.constant 0 : i32
    return %c0_i32, %c0_i32_0 : i32, i32
  }
  func.func @transform_2(%arg0: i32) -> (i32, i32) {
    %c0_i32 = arith.constant 0 : i32
    %c0_i32_0 = arith.constant 0 : i32
    %c0_i32_1 = arith.constant 0 : i32
    return %c0_i32, %c0_i32_0 : i32, i32
  }
  func.func @transform_3(%arg0: i32) -> (i32, i32) {
    %c0_i32 = arith.constant 0 : i32
    %c0_i32_0 = arith.constant 0 : i32
    %c0_i32_1 = arith.constant 0 : i32
    return %c0_i32, %c0_i32_0 : i32, i32
  }
  func.func @transform_4(%arg0: i32) -> (i32, i32) {
    %c0_i32 = arith.constant 0 : i32
    %c0_i32_0 = arith.constant 0 : i32
    %c0_i32_1 = arith.constant 0 : i32
    return %c0_i32, %c0_i32_0 : i32, i32
  }
  func.func @transform_5(%arg0: i32) -> (i32, i32, i32) {
    %c0_i32 = arith.constant 0 : i32
    %c0_i32_0 = arith.constant 0 : i32
    %c0_i32_1 = arith.constant 0 : i32
    return %arg0, %c0_i32, %c0_i32_0 : i32, i32, i32
  }
}

</mosaic_0001>

<llo_original>
// kernel: tpu_custom_call.1
$region0: #{tpu_custom_call.1}
  #allocation0 [shape = 'u32[]', space=smem, size = 0x4, offset = 0x4, fixed_abs, tag = 'smem constant byte address 0x4 - core index']
  #allocation1 [shape = 'u32[144,128]{1,0:T(1,128)}', space=vmem, size = 0x12000, scoped, tag = 'internal scratch']
  #allocation2 [shape = 'f32[4,512]{1,0:T(4,128)}', space=vmem, size = 0x2000, scoped, tag = 'scratch operand']
  %s0 = inlined_call_operand.hbm [shape: f32[2,32,256], index: 0, kind: input, shape index: {}]
  %s1 = inlined_call_operand.vmem [shape: f32[32,2], index: 1, kind: input, shape index: {}]
  %s2 = inlined_call_operand.vmem [shape: f32[32,2], index: 2, kind: input, shape index: {}]
  %s3 = inlined_call_operand.vmem [shape: f32[4,49], index: 3, kind: input, shape index: {}]
  %s4 = inlined_call_operand.vmem [shape: f32[7,256], index: 4, kind: input, shape index: {}]
  %s5 = inlined_call_operand.hbm [shape: f32[2,32,256], index: 5, kind: output, shape index: {}]
  %s6 = sld [smem:[#allocation0]]
  $region34: #{tpu_custom_call.1} parent=0
    _
  %s8 = ssub.s32 1, %s6
  %s9 = scalar_select 0, %s8, %s6
  $region1: #{tpu_custom_call.1} parent=0
    #allocation3 [shape = 'u8[65536]{0}', space=vmem, size = 0x10000, scoped, tag = 'input window, operand 0, single buffered']
    #allocation4 [shape = 's32[1]{0}', space=sflag, size = 0x4, scoped, tag = 'scoped memory for tpu_custom_call.1']
    #allocation5 [shape = 's32[1]{0}', space=sflag, size = 0x4, scoped, tag = 'scoped memory for tpu_custom_call.1']
    #allocation6 [shape = 'u8[65536]{0}', space=vmem, size = 0x10000, scoped, tag = 'output window, operand 0, single buffered']
    %10 = vsyncpa [#allocation4], 0
    %11 = vsyncpa [#allocation5], 0
    // Predicated region
    $region2: #{tpu_custom_call.1} parent=1 // pred_check
      _
    $region3: #{tpu_custom_call.1} parent=1 // pred_check_branch
      %13 = sbr.rel (0) target = $region5
    $region4: #{tpu_custom_call.1} parent=1 // pred_region
      %s15 = ssub.s32 2048, 2048
      %16 = vsyncadd [#allocation4], %s15
      %s17 = sshll.u32 [#allocation3], 4
      %s18 = int_to_ptr.vmem [resolvable:$true] %s17
      %23 = dma.hbm_to_vmem [thread:$0]  %s0, 2048, %s18, [#allocation4], 256, 256, 16
    $region5: #{tpu_custom_call.1} parent=1 // pred_fallthru
      _
    // Predicated region
    $region6: #{tpu_custom_call.1} parent=1 // pred_check
      _
    $region7: #{tpu_custom_call.1} parent=1 // pred_check_branch
      %25 = sbr.rel (0) target = $region9
    $region8: #{tpu_custom_call.1} parent=1 // pred_region
      _
    $region9: #{tpu_custom_call.1} parent=1 // pred_fallthru
      _
    // Predicated region
    $region10: #{tpu_custom_call.1} parent=1 // pred_check
      _
    $region11: #{tpu_custom_call.1} parent=1 // pred_check_branch
      %27 = sbr.rel (0) target = $region13
    $region12: #{tpu_custom_call.1} parent=1 // pred_region
      _
    $region13: #{tpu_custom_call.1} parent=1 // pred_fallthru
      _
    // Predicated region
    $region14: #{tpu_custom_call.1} parent=1 // pred_check
      _
    $region15: #{tpu_custom_call.1} parent=1 // pred_check_branch
      %29 = sbr.rel (0) target = $region17
    $region16: #{tpu_custom_call.1} parent=1 // pred_region
      _
    $region17: #{tpu_custom_call.1} parent=1 // pred_fallthru
      _
    // Predicated region
    $region18: #{tpu_custom_call.1} parent=1 // pred_check
      _
    $region19: #{tpu_custom_call.1} parent=1 // pred_check_branch
      %31 = sbr.rel (0) target = $region21
    $region20: #{tpu_custom_call.1} parent=1 // pred_region
      _
    $region21: #{tpu_custom_call.1} parent=1 // pred_fallthru
      _
    // Predicated region
    $region22: #{tpu_custom_call.1} parent=1 // pred_check
      _
    $region23: #{tpu_custom_call.1} parent=1 // pred_check_branch
      %33 = sbr.rel (0) target = $region25
    $region24: #{tpu_custom_call.1} parent=1 // pred_region
      %34 = dma.done [#allocation4], 2048
    $region25: #{tpu_custom_call.1} parent=1 // pred_fallthru
      _
    %35 = vst [vmem:[#allocation2] sm:$0xf] 0.0
    %36 = vst [vmem:[#allocation2 + $0xc] sm:$0xf] 0.0
    %v37 = vld [vmem:[#allocation3] sm:$0xff]
    %v38 = vld [vmem:[#allocation3 + $0x8] sm:$0xff]
    %v39 = vld [vmem:[#allocation3 + $0x10] sm:$0xff]
    %v40 = vld [vmem:[#allocation3 + $0x18] sm:$0xff]
    %v41 = vld [vmem:[#allocation3 + $0x20] sm:$0xff]
    %v42 = vld [vmem:[#allocation3 + $0x28] sm:$0xff]
    %v43 = vld [vmem:[#allocation3 + $0x30] sm:$0xff]
    %v44 = vld [vmem:[#allocation3 + $0x38] sm:$0xff]
    %v45 = vmax.f32 %v37, %v38
    %46 = vmax.xlane.f32.xlu0 %v45
    %v47 = vpop.xlane.xlu0 %46
    %v48 = vmax.f32 %v39, %v40
    %49 = vmax.xlane.f32.xlu0 %v48
    %v50 = vpop.xlane.xlu0 %49
    %v51 = vmax.f32 %v41, %v42
    %52 = vmax.xlane.f32.xlu0 %v51
    %v53 = vpop.xlane.xlu0 %52
    %v54 = vmax.f32 %v43, %v44
    %55 = vmax.xlane.f32.xlu0 %v54
    %v56 = vpop.xlane.xlu0 %55
    %v57 = vadd.f32 %v37, %v38
    %58 = vadd.xlane.f32.xlu0 %v57
    %v59 = vpop.xlane.xlu0 %58
    %v60 = vadd.f32 %v39, %v40
    %61 = vadd.xlane.f32.xlu0 %v60
    %v62 = vpop.xlane.xlu0 %61
    %v63 = vadd.f32 %v41, %v42
    %64 = vadd.xlane.f32.xlu0 %v63
    %v65 = vpop.xlane.xlu0 %64
    %v66 = vadd.f32 %v43, %v44
    %67 = vadd.xlane.f32.xlu0 %v66
    %v68 = vpop.xlane.xlu0 %67
    %v69 = vmul.f32 %v59, 0.00390625
    %v70 = vmul.f32 %v62, 0.00390625
    %v71 = vmul.f32 %v65, 0.00390625
    %v72 = vmul.f32 %v68, 0.00390625
    %v73 = vlaneseq
    %v74 = vand.u32 %v73, 127
    %vm75 = vcmp.eq.s32.totalorder %v74, 0
    %v76 = vsel %vm75, %v47, %v69
    %v77 = vsel %vm75, %v50, %v70
    %v78 = vsel %vm75, %v53, %v71
    %v79 = vsel %vm75, %v56, %v72
    %v80 = vld [vmem:[%s1] sm:$0xff]
    %v81 = vld [vmem:[%s1 + $0x8] sm:$0xff]
    %v82 = vld [vmem:[%s1 + $0x10] sm:$0xff]
    %v83 = vld [vmem:[%s1 + $0x18] sm:$0xff]
    %85 = vset.pattern.permute.xlu0 0
    %86 = vperm.xlu0 %85, %v80
    %v87 = vpop.permute.xlu0 %86
    %90 = vset.pattern.permute.xlu0 0
    %91 = vperm.xlu0 %90, %v81
    %v92 = vpop.permute.xlu0 %91
    %95 = vset.pattern.permute.xlu0 0
    %96 = vperm.xlu0 %95, %v82
    %v97 = vpop.permute.xlu0 %96
    %100 = vset.pattern.permute.xlu0 0
    %101 = vperm.xlu0 %100, %v83
    %v102 = vpop.permute.xlu0 %101
    %v104 = vmul.f32 %v87, %v76
    %v105 = vmul.f32 %v92, %v77
    %v106 = vmul.f32 %v97, %v78
    %v107 = vmul.f32 %v102, %v79
    %vm108 = vcmask 15360
    %v109 = vsel %vm108, %v104, 0.0
    %v110 = vsel %vm108, %v105, 0.0
    %v111 = vadd.f32 %v109, %v110
    %v112 = vsel %vm108, %v106, 0.0
    %v113 = vadd.f32 %v111, %v112
    %v114 = vsel %vm108, %v107, 0.0
    %v115 = vadd.f32 %v113, %v114
    %v116 = vrot.slane %v115, 4
    %v117 = vadd.f32 %v115, %v116
    %v118 = vrot.slane %v117, 2
    %v119 = vadd.f32 %v117, %v118
    %v120 = vrot.slane %v119, 1
    %v121 = vadd.f32 %v119, %v120
    %v122 = vmax.f32 %v121, 0.0
    %v123 = vsel %vm108, %v122, 0.0
    %124 = vadd.xlane.f32.xlu0 %v123
    %v125 = vpop.xlane.xlu0 %124
    %v126 = vld [vmem:[%s2] sm:$0xff]
    %v127 = vld [vmem:[%s2 + $0x8] sm:$0xff]
    %v128 = vld [vmem:[%s2 + $0x10] sm:$0xff]
    %v129 = vld [vmem:[%s2 + $0x18] sm:$0xff]
    %v130 = vmul.f32 %v126, %v125
    %v131 = vmul.f32 %v127, %v125
    %v132 = vmul.f32 %v128, %v125
    %v133 = vmul.f32 %v129, %v125
    %v134 = vadd.f32 %v130, 0.0
    %v135 = vadd.f32 %v131, 0.0
    %v136 = vadd.f32 %v132, 0.0
    %v137 = vadd.f32 %v133, 0.0
    %138 = vset.pattern.permute.xlu0 1
    %139 = vperm.xlu0 %138, %v80
    %v140 = vpop.permute.xlu0 %139
    %142 = vset.pattern.permute.xlu0 1
    %143 = vperm.xlu0 %142, %v81
    %v144 = vpop.permute.xlu0 %143
    %146 = vset.pattern.permute.xlu0 1
    %147 = vperm.xlu0 %146, %v82
    %v148 = vpop.permute.xlu0 %147
    %150 = vset.pattern.permute.xlu0 1
    %151 = vperm.xlu0 %150, %v83
    %v152 = vpop.permute.xlu0 %151
    %v154 = vmul.f32 %v140, %v76
    %v155 = vmul.f32 %v144, %v77
    %v156 = vmul.f32 %v148, %v78
    %v157 = vmul.f32 %v152, %v79
    %v158 = vsel %vm108, %v154, 0.0
    %v159 = vsel %vm108, %v155, 0.0
    %v160 = vadd.f32 %v158, %v159
    %v161 = vsel %vm108, %v156, 0.0
    %v162 = vadd.f32 %v160, %v161
    %v163 = vsel %vm108, %v157, 0.0
    %v164 = vadd.f32 %v162, %v163
    %v165 = vrot.slane %v164, 4
    %v166 = vadd.f32 %v164, %v165
    %v167 = vrot.slane %v166, 2
    %v168 = vadd.f32 %v166, %v167
    %v169 = vrot.slane %v168, 1
    %v170 = vadd.f32 %v168, %v169
    %v171 = vmax.f32 %v170, 0.0
    %v172 = vsel %vm108, %v171, 0.0
    %173 = vadd.xlane.f32.xlu0 %v172
    %v174 = vpop.xlane.xlu0 %173
    %v175 = vmul.f32 %v126, %v174
    %v176 = vmul.f32 %v127, %v174
    %v177 = vmul.f32 %v128, %v174
    %v178 = vmul.f32 %v129, %v174
    %183 = vrot.lane.b32.xlu0 %v175, 127
    %v184 = vpop.permute.xlu0 %183
    %185 = vrot.lane.b32.xlu0 %v176, 127
    %v186 = vpop.permute.xlu0 %185
    %187 = vrot.lane.b32.xlu0 %v177, 127
    %v188 = vpop.permute.xlu0 %187
    %189 = vrot.lane.b32.xlu0 %v178, 127
    %v190 = vpop.permute.xlu0 %189
    %v195 = vadd.f32 %v134, %v184
    %v196 = vadd.f32 %v135, %v186
    %v197 = vadd.f32 %v136, %v188
    %v198 = vadd.f32 %v137, %v190
    %v199 = vxor.u32 %v195, 2147483648
    %v200 = vxor.u32 %v196, 2147483648
    %v201 = vxor.u32 %v197, 2147483648
    %v202 = vxor.u32 %v198, 2147483648
    %v203 = vmul.f32 %v199, 1.442695
    %v204 = vpow.pop %v203
    %v205 = vmul.f32 %v200, 1.442695
    %v206 = vpow.pop %v205
    %v207 = vmul.f32 %v201, 1.442695
    %v208 = vpow.pop %v207
    %v209 = vmul.f32 %v202, 1.442695
    %v210 = vpow.pop %v209
    %v211 = vadd.f32 %v204, 1.0
    %v212 = vadd.f32 %v206, 1.0
    %v213 = vadd.f32 %v208, 1.0
    %v214 = vadd.f32 %v210, 1.0
    %v215 = vrcp.pop %v211
    %v216 = vmul.f32 1.0, %v215
    %v217 = vrcp.pop %v212
    %v218 = vmul.f32 1.0, %v217
    %v219 = vrcp.pop %v213
    %v220 = vmul.f32 1.0, %v219
    %v221 = vrcp.pop %v214
    %v222 = vmul.f32 1.0, %v221
    %224 = vset.pattern.permute.xlu0 0
    %225 = vperm.xlu0 %224, %v216
    %v226 = vpop.permute.xlu0 %225
    %229 = vset.pattern.permute.xlu0 0
    %230 = vperm.xlu0 %229, %v218
    %v231 = vpop.permute.xlu0 %230
    %234 = vset.pattern.permute.xlu0 0
    %235 = vperm.xlu0 %234, %v220
    %v236 = vpop.permute.xlu0 %235
    %239 = vset.pattern.permute.xlu0 0
    %240 = vperm.xlu0 %239, %v222
    %v241 = vpop.permute.xlu0 %240
    %v243 = vmul.f32 %v37, %v226
    %v244 = vmul.f32 %v38, %v226
    %v245 = vmul.f32 %v39, %v231
    %v246 = vmul.f32 %v40, %v231
    %v247 = vmul.f32 %v41, %v236
    %v248 = vmul.f32 %v42, %v236
    %v249 = vmul.f32 %v43, %v241
    %v250 = vmul.f32 %v44, %v241
    %v251 = vmax.f32 %v243, %v247
    %v252 = vmax.f32 %v245, %v249
    %v253 = vmax.f32 %v251, %v252
    %v254 = vrot.slane %v253, 4
    %v255 = vmax.f32 %v253, %v254
    %v256 = vrot.slane %v255, 2
    %v257 = vmax.f32 %v255, %v256
    %v258 = vrot.slane %v257, 1
    %v259 = vmax.f32 %v257, %v258
    %v260 = vmax.f32 %v244, %v248
    %v261 = vmax.f32 %v246, %v250
    %v262 = vmax.f32 %v260, %v261
    %v263 = vrot.slane %v262, 4
    %v264 = vmax.f32 %v262, %v263
    %v265 = vrot.slane %v264, 2
    %v266 = vmax.f32 %v264, %v265
    %v267 = vrot.slane %v266, 1
    %v268 = vmax.f32 %v266, %v267
    %v269 = vadd.f32 %v243, %v245
    %v270 = vadd.f32 %v269, %v247
    %v271 = vadd.f32 %v270, %v249
    %v272 = vrot.slane %v271, 4
    %v273 = vadd.f32 %v271, %v272
    %v274 = vrot.slane %v273, 2
    %v275 = vadd.f32 %v273, %v274
    %v276 = vrot.slane %v275, 1
    %v277 = vadd.f32 %v275, %v276
    %v278 = vadd.f32 %v244, %v246
    %v279 = vadd.f32 %v278, %v248
    %v280 = vadd.f32 %v279, %v250
    %v281 = vrot.slane %v280, 4
    %v282 = vadd.f32 %v280, %v281
    %v283 = vrot.slane %v282, 2
    %v284 = vadd.f32 %v282, %v283
    %v285 = vrot.slane %v284, 1
    %v286 = vadd.f32 %v284, %v285
    %v287 = vmul.f32 %v277, 0.03125
    %v288 = vmul.f32 %v286, 0.03125
    %v291 = vcombine.low %v259, %v268
    %v293 = vunpack.c.l.s4 1966171168
    %v294 = vunpack.c.0.s8 %v293
    %v295 = vlaneseq
    %v296 = vshrl.u32 %v295, 7
    %v297 = vsub.s32 %v294, %v296
    %v298 = vrot.slane %v291, %v297
    %v300 = vunpack.c.l.s4 1966171168
    %v301 = vunpack.c.0.s8 %v300
    %v302 = vlaneseq
    %v303 = vshrl.u32 %v302, 7
    %v304 = vsub.s32 %v301, %v303
    %v305 = vrot.slane %v298, %v304
    %v307 = vlaneseq
    %vm308 = vcmp.ge.s32.totalorder %v307, 0
    %vm309 = vcmp.lt.s32.totalorder %v307, 256
    %vm310 = vmand %vm308, %vm309
    %s311 = scalar_lea.vmem [#allocation2], 4
    %312 = vst.msk [vmem:[%s311] ss:$4 sm:$0x3] %vm310, %v305
    %v315 = vcombine.low %v287, %v288
    %v317 = vunpack.c.l.s4 1966171168
    %v318 = vunpack.c.0.s8 %v317
    %v319 = vlaneseq
    %v320 = vshrl.u32 %v319, 7
    %v321 = vsub.s32 %v318, %v320
    %v322 = vrot.slane %v315, %v321
    %v324 = vunpack.c.l.s4 1966171168
    %v325 = vunpack.c.0.s8 %v324
    %v326 = vlaneseq
    %v327 = vshrl.u32 %v326, 7
    %v328 = vsub.s32 %v325, %v327
    %v329 = vrot.slane %v322, %v328
    %s331 = scalar_lea.vmem [#allocation2], 6
    %332 = vst.msk [vmem:[%s331] ss:$4 sm:$0x3] %vm310, %v329
    %s333 = scalar_lea.vmem [#allocation3], 64
    %v334 = vld [vmem:[%s333] sm:$0xff]
    %v335 = vld [vmem:[%s333 + $0x8] sm:$0xff]
    %v336 = vld [vmem:[%s333 + $0x10] sm:$0xff]
    %v337 = vld [vmem:[%s333 + $0x18] sm:$0xff]
    %v338 = vld [vmem:[%s333 + $0x20] sm:$0xff]
    %v339 = vld [vmem:[%s333 + $0x28] sm:$0xff]
    %v340 = vld [vmem:[%s333 + $0x30] sm:$0xff]
    %v341 = vld [vmem:[%s333 + $0x38] sm:$0xff]
    %v342 = vmax.f32 %v334, %v335
    %343 = vmax.xlane.f32.xlu0 %v342
    %v344 = vpop.xlane.xlu0 %343
    %v345 = vmax.f32 %v336, %v337
    %346 = vmax.xlane.f32.xlu0 %v345
    %v347 = vpop.xlane.xlu0 %346
    %v348 = vmax.f32 %v338, %v339
    %349 = vmax.xlane.f32.xlu0 %v348
    %v350 = vpop.xlane.xlu0 %349
    %v351 = vmax.f32 %v340, %v341
    %352 = vmax.xlane.f32.xlu0 %v351
    %v353 = vpop.xlane.xlu0 %352
    %v354 = vadd.f32 %v334, %v335
    %355 = vadd.xlane.f32.xlu0 %v354
    %v356 = vpop.xlane.xlu0 %355
    %v357 = vadd.f32 %v336, %v337
    %358 = vadd.xlane.f32.xlu0 %v357
    %v359 = vpop.xlane.xlu0 %358
    %v360 = vadd.f32 %v338, %v339
    %361 = vadd.xlane.f32.xlu0 %v360
    %v362 = vpop.xlane.xlu0 %361
    %v363 = vadd.f32 %v340, %v341
    %364 = vadd.xlane.f32.xlu0 %v363
    %v365 = vpop.xlane.xlu0 %364
    %v366 = vmul.f32 %v356, 0.00390625
    %v367 = vmul.f32 %v359, 0.00390625
    %v368 = vmul.f32 %v362, 0.00390625
    %v369 = vmul.f32 %v365, 0.00390625
    %v370 = vsel %vm75, %v344, %v366
    %v371 = vsel %vm75, %v347, %v367
    %v372 = vsel %vm75, %v350, %v368
    %v373 = vsel %vm75, %v353, %v369
    %v374 = vld [vmem:[%s1] sm:$0xff]
    %v375 = vld [vmem:[%s1 + $0x8] sm:$0xff]
    %v376 = vld [vmem:[%s1 + $0x10] sm:$0xff]
    %v377 = vld [vmem:[%s1 + $0x18] sm:$0xff]
    %379 = vset.pattern.permute.xlu0 0
    %380 = vperm.xlu0 %379, %v374
    %v381 = vpop.permute.xlu0 %380
    %384 = vset.pattern.permute.xlu0 0
    %385 = vperm.xlu0 %384, %v375
    %v386 = vpop.permute.xlu0 %385
    %389 = vset.pattern.permute.xlu0 0
    %390 = vperm.xlu0 %389, %v376
    %v391 = vpop.permute.xlu0 %390
    %394 = vset.pattern.permute.xlu0 0
    %395 = vperm.xlu0 %394, %v377
    %v396 = vpop.permute.xlu0 %395
    %v398 = vmul.f32 %v381, %v370
    %v399 = vmul.f32 %v386, %v371
    %v400 = vmul.f32 %v391, %v372
    %v401 = vmul.f32 %v396, %v373
    %v402 = vsel %vm108, %v398, 0.0
    %v403 = vsel %vm108, %v399, 0.0
    %v404 = vadd.f32 %v402, %v403
    %v405 = vsel %vm108, %v400, 0.0
    %v406 = vadd.f32 %v404, %v405
    %v407 = vsel %vm108, %v401, 0.0
    %v408 = vadd.f32 %v406, %v407
    %v409 = vrot.slane %v408, 4
    %v410 = vadd.f32 %v408, %v409
    %v411 = vrot.slane %v410, 2
    %v412 = vadd.f32 %v410, %v411
    %v413 = vrot.slane %v412, 1
    %v414 = vadd.f32 %v412, %v413
    %v415 = vmax.f32 %v414, 0.0
    %v416 = vsel %vm108, %v415, 0.0
    %417 = vadd.xlane.f32.xlu0 %v416
    %v418 = vpop.xlane.xlu0 %417
    %v419 = vld [vmem:[%s2] sm:$0xff]
    %v420 = vld [vmem:[%s2 + $0x8] sm:$0xff]
    %v421 = vld [vmem:[%s2 + $0x10] sm:$0xff]
    %v422 = vld [vmem:[%s2 + $0x18] sm:$0xff]
    %v423 = vmul.f32 %v419, %v418
    %v424 = vmul.f32 %v420, %v418
    %v425 = vmul.f32 %v421, %v418
    %v426 = vmul.f32 %v422, %v418
    %v427 = vadd.f32 %v423, 0.0
    %v428 = vadd.f32 %v424, 0.0
    %v429 = vadd.f32 %v425, 0.0
    %v430 = vadd.f32 %v426, 0.0
    %431 = vset.pattern.permute.xlu0 1
    %432 = vperm.xlu0 %431, %v374
    %v433 = vpop.permute.xlu0 %432
    %435 = vset.pattern.permute.xlu0 1
    %436 = vperm.xlu0 %435, %v375
    %v437 = vpop.permute.xlu0 %436
    %439 = vset.pattern.permute.xlu0 1
    %440 = vperm.xlu0 %439, %v376
    %v441 = vpop.permute.xlu0 %440
    %443 = vset.pattern.permute.xlu0 1
    %444 = vperm.xlu0 %443, %v377
    %v445 = vpop.permute.xlu0 %444
    %v447 = vmul.f32 %v433, %v370
    %v448 = vmul.f32 %v437, %v371
    %v449 = vmul.f32 %v441, %v372
    %v450 = vmul.f32 %v445, %v373
    %v451 = vsel %vm108, %v447, 0.0
    %v452 = vsel %vm108, %v448, 0.0
    %v453 = vadd.f32 %v451, %v452
    %v454 = vsel %vm108, %v449, 0.0
    %v455 = vadd.f32 %v453, %v454
    %v456 = vsel %vm108, %v450, 0.0
    %v457 = vadd.f32 %v455, %v456
    %v458 = vrot.slane %v457, 4
    %v459 = vadd.f32 %v457, %v458
    %v460 = vrot.slane %v459, 2
    %v461 = vadd.f32 %v459, %v460
    %v462 = vrot.slane %v461, 1
    %v463 = vadd.f32 %v461, %v462
    %v464 = vmax.f32 %v463, 0.0
    %v465 = vsel %vm108, %v464, 0.0
    %466 = vadd.xlane.f32.xlu0 %v465
    %v467 = vpop.xlane.xlu0 %466
    %v468 = vmul.f32 %v419, %v467
    %v469 = vmul.f32 %v420, %v467
    %v470 = vmul.f32 %v421, %v467
    %v471 = vmul.f32 %v422, %v467
    %476 = vrot.lane.b32.xlu0 %v468, 127
    %v477 = vpop.permute.xlu0 %476
    %478 = vrot.lane.b32.xlu0 %v469, 127
    %v479 = vpop.permute.xlu0 %478
    %480 = vrot.lane.b32.xlu0 %v470, 127
    %v481 = vpop.permute.xlu0 %480
    %482 = vrot.lane.b32.xlu0 %v471, 127
    %v483 = vpop.permute.xlu0 %482
    %v488 = vadd.f32 %v427, %v477
    %v489 = vadd.f32 %v428, %v479
    %v490 = vadd.f32 %v429, %v481
    %v491 = vadd.f32 %v430, %v483
    %v492 = vxor.u32 %v488, 2147483648
    %v493 = vxor.u32 %v489, 2147483648
    %v494 = vxor.u32 %v490, 2147483648
    %v495 = vxor.u32 %v491, 2147483648
    %v496 = vmul.f32 %v492, 1.442695
    %v497 = vpow.pop %v496
    %v498 = vmul.f32 %v493, 1.442695
    %v499 = vpow.pop %v498
    %v500 = vmul.f32 %v494, 1.442695
    %v501 = vpow.pop %v500
    %v502 = vmul.f32 %v495, 1.442695
    %v503 = vpow.pop %v502
    %v504 = vadd.f32 %v497, 1.0
    %v505 = vadd.f32 %v499, 1.0
    %v506 = vadd.f32 %v501, 1.0
    %v507 = vadd.f32 %v503, 1.0
    %v508 = vrcp.pop %v504
    %v509 = vmul.f32 1.0, %v508
    %v510 = vrcp.pop %v505
    %v511 = vmul.f32 1.0, %v510
    %v512 = vrcp.pop %v506
    %v513 = vmul.f32 1.0, %v512
    %v514 = vrcp.pop %v507
    %v515 = vmul.f32 1.0, %v514
    %517 = vset.pattern.permute.xlu0 0
    %518 = vperm.xlu0 %517, %v509
    %v519 = vpop.permute.xlu0 %518
    %522 = vset.pattern.permute.xlu0 0
    %523 = vperm.xlu0 %522, %v511
    %v524 = vpop.permute.xlu0 %523
    %527 = vset.pattern.permute.xlu0 0
    %528 = vperm.xlu0 %527, %v513
    %v529 = vpop.permute.xlu0 %528
    %532 = vset.pattern.permute.xlu0 0
    %533 = vperm.xlu0 %532, %v515
    %v534 = vpop.permute.xlu0 %533
    %v536 = vmul.f32 %v334, %v519
    %v537 = vmul.f32 %v335, %v519
    %v538 = vmul.f32 %v336, %v524
    %v539 = vmul.f32 %v337, %v524
    %v540 = vmul.f32 %v338, %v529
    %v541 = vmul.f32 %v339, %v529
    %v542 = vmul.f32 %v340, %v534
    %v543 = vmul.f32 %v341, %v534
    %v544 = vmax.f32 %v536, %v540
    %v545 = vmax.f32 %v538, %v542
    %v546 = vmax.f32 %v544, %v545
    %v547 = vrot.slane %v546, 4
    %v548 = vmax.f32 %v546, %v547
    %v549 = vrot.slane %v548, 2
    %v550 = vmax.f32 %v548, %v549
    %v551 = vrot.slane %v550, 1
    %v552 = vmax.f32 %v550, %v551
    %v553 = vmax.f32 %v537, %v541
    %v554 = vmax.f32 %v539, %v543
    %v555 = vmax.f32 %v553, %v554
    %v556 = vrot.slane %v555, 4
    %v557 = vmax.f32 %v555, %v556
    %v558 = vrot.slane %v557, 2
    %v559 = vmax.f32 %v557, %v558
    %v560 = vrot.slane %v559, 1
    %v561 = vmax.f32 %v559, %v560
    %v562 = vadd.f32 %v536, %v538
    %v563 = vadd.f32 %v562, %v540
    %v564 = vadd.f32 %v563, %v542
    %v565 = vrot.slane %v564, 4
    %v566 = vadd.f32 %v564, %v565
    %v567 = vrot.slane %v566, 2
    %v568 = vadd.f32 %v566, %v567
    %v569 = vrot.slane %v568, 1
    %v570 = vadd.f32 %v568, %v569
    %v571 = vadd.f32 %v537, %v539
    %v572 = vadd.f32 %v571, %v541
    %v573 = vadd.f32 %v572, %v543
    %v574 = vrot.slane %v573, 4
    %v575 = vadd.f32 %v573, %v574
    %v576 = vrot.slane %v575, 2
    %v577 = vadd.f32 %v575, %v576
    %v578 = vrot.slane %v577, 1
    %v579 = vadd.f32 %v577, %v578
    %v580 = vmul.f32 %v570, 0.03125
    %v581 = vmul.f32 %v579, 0.03125
    %v584 = vcombine.low %v552, %v561
    %v586 = vunpack.c.l.s4 1966171168
    %v587 = vunpack.c.0.s8 %v586
    %v588 = vlaneseq
    %v589 = vshrl.u32 %v588, 7
    %v590 = vsub.s32 %v587, %v589
    %v591 = vrot.slane %v584, %v590
    %v593 = vunpack.c.l.s4 1966171168
    %v594 = vunpack.c.0.s8 %v593
    %v595 = vlaneseq
    %v596 = vshrl.u32 %v595, 7
    %v597 = vsub.s32 %v594, %v596
    %v598 = vrot.slane %v591, %v597
    %s600 = scalar_lea.vmem [#allocation2], 5
    %601 = vst.msk [vmem:[%s600] ss:$4 sm:$0x3] %vm310, %v598
    %v604 = vcombine.low %v580, %v581
    %v606 = vunpack.c.l.s4 1966171168
    %v607 = vunpack.c.0.s8 %v606
    %v608 = vlaneseq
    %v609 = vshrl.u32 %v608, 7
    %v610 = vsub.s32 %v607, %v609
    %v611 = vrot.slane %v604, %v610
    %v613 = vunpack.c.l.s4 1966171168
    %v614 = vunpack.c.0.s8 %v613
    %v615 = vlaneseq
    %v616 = vshrl.u32 %v615, 7
    %v617 = vsub.s32 %v614, %v616
    %v618 = vrot.slane %v611, %v617
    %s620 = scalar_lea.vmem [#allocation2], 7
    %621 = vst.msk [vmem:[%s620] ss:$4 sm:$0x3] %vm310, %v618
    %v622 = vld [vmem:[#allocation2] sm:$0xff]
    %v623 = vld [vmem:[#allocation2 + $0x8] sm:$0xf]
    %v624 = vld [vmem:[%s3] sm:$0xf]
    %626 = vset.pattern.permute.xlu0 0
    %627 = vperm.xlu0 %626, %v624
    %v628 = vpop.permute.xlu0 %627
    %v632 = vcombine.high %v622, %v622
    %633 = vrot.lane.b32.xlu0 %v622, 51
    %v634 = vpop.permute.xlu0 %633
    %635 = vrot.lane.b32.xlu0 %v632, 51
    %v636 = vpop.permute.xlu0 %635
    %637 = vrot.lane.b32.xlu0 %v623, 51
    %v638 = vpop.permute.xlu0 %637
    %vm639 = vcmask 416768
    %v640 = vsel %vm639, %v634, %v636
    %v641 = vsel %vm639, %v636, %v638
    %v644 = vmul.f32 %v628, %v640
    %v645 = vmul.f32 %v628, %v641
    %v646 = vadd.f32 %v644, 0.0
    %v647 = vadd.f32 %v645, 0.0
    %v648 = vld [vmem:[#allocation2] sm:$0xff]
    %v649 = vld [vmem:[#allocation2 + $0x8] sm:$0xf]
    %v650 = vld [vmem:[%s3] sm:$0xf]
    %652 = vset.pattern.permute.xlu0 7
    %653 = vperm.xlu0 %652, %v650
    %v654 = vpop.permute.xlu0 %653
    %v658 = vcombine.high %v648, %v648
    %659 = vrot.lane.b32.xlu0 %v648, 35
    %v660 = vpop.permute.xlu0 %659
    %661 = vrot.lane.b32.xlu0 %v658, 35
    %v662 = vpop.permute.xlu0 %661
    %663 = vrot.lane.b32.xlu0 %v649, 35
    %v664 = vpop.permute.xlu0 %663
    %vm665 = vcmask 285696
    %v666 = vsel %vm665, %v660, %v662
    %v667 = vsel %vm665, %v662, %v664
    %v670 = vmul.f32 %v654, %v666
    %v671 = vmul.f32 %v654, %v667
    %v672 = vadd.f32 %v646, %v670
    %v673 = vadd.f32 %v647, %v671
    %v674 = vld [vmem:[#allocation2] sm:$0xff]
    %v675 = vld [vmem:[#allocation2 + $0x8] sm:$0xf]
    %v676 = vld [vmem:[%s3] sm:$0xf]
    %678 = vset.pattern.permute.xlu0 14
    %679 = vperm.xlu0 %678, %v676
    %v680 = vpop.permute.xlu0 %679
    %v684 = vcombine.high %v674, %v674
    %685 = vrot.lane.b32.xlu0 %v674, 19
    %v686 = vpop.permute.xlu0 %685
    %687 = vrot.lane.b32.xlu0 %v684, 19
    %v688 = vpop.permute.xlu0 %687
    %689 = vrot.lane.b32.xlu0 %v675, 19
    %v690 = vpop.permute.xlu0 %689
    %vm691 = vcmask 154624
    %v692 = vsel %vm691, %v686, %v688
    %v693 = vsel %vm691, %v688, %v690
    %v696 = vmul.f32 %v680, %v692
    %v697 = vmul.f32 %v680, %v693
    %v698 = vadd.f32 %v672, %v696
    %v699 = vadd.f32 %v673, %v697
    %v700 = vld [vmem:[#allocation2] sm:$0xff]
    %v701 = vld [vmem:[#allocation2 + $0x8] sm:$0xf]
    %v702 = vld [vmem:[%s3] sm:$0xf]
    %704 = vset.pattern.permute.xlu0 21
    %705 = vperm.xlu0 %704, %v702
    %v706 = vpop.permute.xlu0 %705
    %v710 = vcombine.high %v700, %v700
    %711 = vrot.lane.b32.xlu0 %v700, 3
    %v712 = vpop.permute.xlu0 %711
    %713 = vrot.lane.b32.xlu0 %v710, 3
    %v714 = vpop.permute.xlu0 %713
    %715 = vrot.lane.b32.xlu0 %v701, 3
    %v716 = vpop.permute.xlu0 %715
    %vm717 = vcmask 23552
    %v718 = vsel %vm717, %v712, %v714
    %v719 = vsel %vm717, %v714, %v716
    %v722 = vmul.f32 %v706, %v718
    %v723 = vmul.f32 %v706, %v719
    %v724 = vadd.f32 %v698, %v722
    %v725 = vadd.f32 %v699, %v723
    %v726 = vld [vmem:[#allocation2 + $0x4] sm:$0xff]
    %v727 = vld [vmem:[#allocation2 + $0xc] sm:$0xf]
    %v728 = vld [vmem:[%s3] sm:$0xf]
    %730 = vset.pattern.permute.xlu0 28
    %731 = vperm.xlu0 %730, %v728
    %v732 = vpop.permute.xlu0 %731
    %v736 = vcombine.high %v726, %v726
    %737 = vrot.lane.b32.xlu0 %v726, 115
    %v738 = vpop.permute.xlu0 %737
    %739 = vrot.lane.b32.xlu0 %v736, 115
    %v740 = vpop.permute.xlu0 %739
    %741 = vrot.lane.b32.xlu0 %v727, 115
    %v742 = vpop.permute.xlu0 %741
    %vm743 = vcmask 941056
    %v744 = vsel %vm743, %v738, %v740
    %v745 = vsel %vm743, %v740, %v742
    %v748 = vmul.f32 %v732, %v744
    %v749 = vmul.f32 %v732, %v745
    %v750 = vadd.f32 %v724, %v748
    %v751 = vadd.f32 %v725, %v749
    %v752 = vld [vmem:[#allocation2 + $0x4] sm:$0xff]
    %v753 = vld [vmem:[#allocation2 + $0xc] sm:$0xf]
    %v754 = vld [vmem:[%s3] sm:$0xf]
    %756 = vset.pattern.permute.xlu0 35
    %757 = vperm.xlu0 %756, %v754
    %v758 = vpop.permute.xlu0 %757
    %v762 = vcombine.high %v752, %v752
    %763 = vrot.lane.b32.xlu0 %v752, 99
    %v764 = vpop.permute.xlu0 %763
    %765 = vrot.lane.b32.xlu0 %v762, 99
    %v766 = vpop.permute.xlu0 %765
    %767 = vrot.lane.b32.xlu0 %v753, 99
    %v768 = vpop.permute.xlu0 %767
    %vm769 = vcmask 809984
    %v770 = vsel %vm769, %v764, %v766
    %v771 = vsel %vm769, %v766, %v768
    %v774 = vmul.f32 %v758, %v770
    %v775 = vmul.f32 %v758, %v771
    %v776 = vadd.f32 %v750, %v774
    %v777 = vadd.f32 %v751, %v775
    %v778 = vld [vmem:[#allocation2 + $0x4] sm:$0xff]
    %v779 = vld [vmem:[#allocation2 + $0xc] sm:$0xf]
    %v780 = vld [vmem:[%s3] sm:$0xf]
    %782 = vset.pattern.permute.xlu0 42
    %783 = vperm.xlu0 %782, %v780
    %v784 = vpop.permute.xlu0 %783
    %v788 = vcombine.high %v778, %v778
    %789 = vrot.lane.b32.xlu0 %v778, 83
    %v790 = vpop.permute.xlu0 %789
    %791 = vrot.lane.b32.xlu0 %v788, 83
    %v792 = vpop.permute.xlu0 %791
    %793 = vrot.lane.b32.xlu0 %v779, 83
    %v794 = vpop.permute.xlu0 %793
    %vm795 = vcmask 678912
    %v796 = vsel %vm795, %v790, %v792
    %v797 = vsel %vm795, %v792, %v794
    %v800 = vmul.f32 %v784, %v796
    %v801 = vmul.f32 %v784, %v797
    %v802 = vadd.f32 %v776, %v800
    %v803 = vadd.f32 %v777, %v801
    %v804 = vld [vmem:[%s4] ss:$8 sm:$0x3]
    %v806 = vlaneseq
    %v807 = vshrl.u32 %v806, 7
    %v808 = vsub.s32 0, %v807
    %v809 = vrot.slane %v804, %v808
    %v810 = vlaneseq
    %v811 = vshrl.u32 %v810, 7
    %v812 = vsub.s32 1, %v811
    %v813 = vrot.slane %v804, %v812
    %v816 = vmul.f32 %v802, %v809
    %v817 = vmul.f32 %v803, %v813
    %v818 = vadd.f32 %v816, 0.0
    %v819 = vadd.f32 %v817, 0.0
    %v820 = vld [vmem:[#allocation2] sm:$0xff]
    %v821 = vld [vmem:[#allocation2 + $0x8] sm:$0xf]
    %v822 = vld [vmem:[%s3] sm:$0xf]
    %824 = vset.pattern.permute.xlu0 1
    %825 = vperm.xlu0 %824, %v822
    %v826 = vpop.permute.xlu0 %825
    %v830 = vcombine.high %v820, %v820
    %831 = vrot.lane.b32.xlu0 %v820, 50
    %v832 = vpop.permute.xlu0 %831
    %833 = vrot.lane.b32.xlu0 %v830, 50
    %v834 = vpop.permute.xlu0 %833
    %835 = vrot.lane.b32.xlu0 %v821, 50
    %v836 = vpop.permute.xlu0 %835
    %vm837 = vcmask 408576
    %v838 = vsel %vm837, %v832, %v834
    %v839 = vsel %vm837, %v834, %v836
    %v842 = vmul.f32 %v826, %v838
    %v843 = vmul.f32 %v826, %v839
    %v844 = vadd.f32 %v842, 0.0
    %v845 = vadd.f32 %v843, 0.0
    %v846 = vld [vmem:[#allocation2] sm:$0xff]
    %v847 = vld [vmem:[#allocation2 + $0x8] sm:$0xf]
    %v848 = vld [vmem:[%s3] sm:$0xf]
    %850 = vset.pattern.permute.xlu0 8
    %851 = vperm.xlu0 %850, %v848
    %v852 = vpop.permute.xlu0 %851
    %v856 = vcombine.high %v846, %v846
    %857 = vrot.lane.b32.xlu0 %v846, 34
    %v858 = vpop.permute.xlu0 %857
    %859 = vrot.lane.b32.xlu0 %v856, 34
    %v860 = vpop.permute.xlu0 %859
    %861 = vrot.lane.b32.xlu0 %v847, 34
    %v862 = vpop.permute.xlu0 %861
    %vm863 = vcmask 277504
    %v864 = vsel %vm863, %v858, %v860
    %v865 = vsel %vm863, %v860, %v862
    %v868 = vmul.f32 %v852, %v864
    %v869 = vmul.f32 %v852, %v865
    %v870 = vadd.f32 %v844, %v868
    %v871 = vadd.f32 %v845, %v869
    %v872 = vld [vmem:[#allocation2] sm:$0xff]
    %v873 = vld [vmem:[#allocation2 + $0x8] sm:$0xf]
    %v874 = vld [vmem:[%s3] sm:$0xf]
    %876 = vset.pattern.permute.xlu0 15
    %877 = vperm.xlu0 %876, %v874
    %v878 = vpop.permute.xlu0 %877
    %v882 = vcombine.high %v872, %v872
    %883 = vrot.lane.b32.xlu0 %v872, 18
    %v884 = vpop.permute.xlu0 %883
    %885 = vrot.lane.b32.xlu0 %v882, 18
    %v886 = vpop.permute.xlu0 %885
    %887 = vrot.lane.b32.xlu0 %v873, 18
    %v888 = vpop.permute.xlu0 %887
    %vm889 = vcmask 146432
    %v890 = vsel %vm889, %v884, %v886
    %v891 = vsel %vm889, %v886, %v888
    %v894 = vmul.f32 %v878, %v890
    %v895 = vmul.f32 %v878, %v891
    %v896 = vadd.f32 %v870, %v894
    %v897 = vadd.f32 %v871, %v895
    %v898 = vld [vmem:[#allocation2] sm:$0xff]
    %v899 = vld [vmem:[#allocation2 + $0x8] sm:$0xf]
    %v900 = vld [vmem:[%s3] sm:$0xf]
    %902 = vset.pattern.permute.xlu0 22
    %903 = vperm.xlu0 %902, %v900
    %v904 = vpop.permute.xlu0 %903
    %v908 = vcombine.high %v898, %v898
    %909 = vrot.lane.b32.xlu0 %v898, 2
    %v910 = vpop.permute.xlu0 %909
    %911 = vrot.lane.b32.xlu0 %v908, 2
    %v912 = vpop.permute.xlu0 %911
    %913 = vrot.lane.b32.xlu0 %v899, 2
    %v914 = vpop.permute.xlu0 %913
    %v915 = vsel %vm108, %v910, %v912
    %v916 = vsel %vm108, %v912, %v914
    %v919 = vmul.f32 %v904, %v915
    %v920 = vmul.f32 %v904, %v916
    %v921 = vadd.f32 %v896, %v919
    %v922 = vadd.f32 %v897, %v920
    %v923 = vld [vmem:[#allocation2 + $0x4] sm:$0xff]
    %v924 = vld [vmem:[#allocation2 + $0xc] sm:$0xf]
    %v925 = vld [vmem:[%s3] sm:$0xf]
    %927 = vset.pattern.permute.xlu0 29
    %928 = vperm.xlu0 %927, %v925
    %v929 = vpop.permute.xlu0 %928
    %v933 = vcombine.high %v923, %v923
    %934 = vrot.lane.b32.xlu0 %v923, 114
    %v935 = vpop.permute.xlu0 %934
    %936 = vrot.lane.b32.xlu0 %v933, 114
    %v937 = vpop.permute.xlu0 %936
    %938 = vrot.lane.b32.xlu0 %v924, 114
    %v939 = vpop.permute.xlu0 %938
    %vm940 = vcmask 932864
    %v941 = vsel %vm940, %v935, %v937
    %v942 = vsel %vm940, %v937, %v939
    %v945 = vmul.f32 %v929, %v941
    %v946 = vmul.f32 %v929, %v942
    %v947 = vadd.f32 %v921, %v945
    %v948 = vadd.f32 %v922, %v946
    %v949 = vld [vmem:[#allocation2 + $0x4] sm:$0xff]
    %v950 = vld [vmem:[#allocation2 + $0xc] sm:$0xf]
    %v951 = vld [vmem:[%s3] sm:$0xf]
    %953 = vset.pattern.permute.xlu0 36
    %954 = vperm.xlu0 %953, %v951
    %v955 = vpop.permute.xlu0 %954
    %v959 = vcombine.high %v949, %v949
    %960 = vrot.lane.b32.xlu0 %v949, 98
    %v961 = vpop.permute.xlu0 %960
    %962 = vrot.lane.b32.xlu0 %v959, 98
    %v963 = vpop.permute.xlu0 %962
    %964 = vrot.lane.b32.xlu0 %v950, 98
    %v965 = vpop.permute.xlu0 %964
    %vm966 = vcmask 801792
    %v967 = vsel %vm966, %v961, %v963
    %v968 = vsel %vm966, %v963, %v965
    %v971 = vmul.f32 %v955, %v967
    %v972 = vmul.f32 %v955, %v968
    %v973 = vadd.f32 %v947, %v971
    %v974 = vadd.f32 %v948, %v972
    %v975 = vld [vmem:[#allocation2 + $0x4] sm:$0xff]
    %v976 = vld [vmem:[#allocation2 + $0xc] sm:$0xf]
    %v977 = vld [vmem:[%s3] sm:$0xf]
    %979 = vset.pattern.permute.xlu0 43
    %980 = vperm.xlu0 %979, %v977
    %v981 = vpop.permute.xlu0 %980
    %v985 = vcombine.high %v975, %v975
    %986 = vrot.lane.b32.xlu0 %v975, 82
    %v987 = vpop.permute.xlu0 %986
    %988 = vrot.lane.b32.xlu0 %v985, 82
    %v989 = vpop.permute.xlu0 %988
    %990 = vrot.lane.b32.xlu0 %v976, 82
    %v991 = vpop.permute.xlu0 %990
    %vm992 = vcmask 670720
    %v993 = vsel %vm992, %v987, %v989
    %v994 = vsel %vm992, %v989, %v991
    %v997 = vmul.f32 %v981, %v993
    %v998 = vmul.f32 %v981, %v994
    %v999 = vadd.f32 %v973, %v997
    %v1000 = vadd.f32 %v974, %v998
    %s1001 = scalar_lea.vmem %s4, 1
    %v1002 = vld [vmem:[%s1001] ss:$8 sm:$0x3]
    %v1004 = vlaneseq
    %v1005 = vshrl.u32 %v1004, 7
    %v1006 = vsub.s32 0, %v1005
    %v1007 = vrot.slane %v1002, %v1006
    %v1008 = vlaneseq
    %v1009 = vshrl.u32 %v1008, 7
    %v1010 = vsub.s32 1, %v1009
    %v1011 = vrot.slane %v1002, %v1010
    %v1014 = vmul.f32 %v999, %v1007
    %v1015 = vmul.f32 %v1000, %v1011
    %v1016 = vadd.f32 %v818, %v1014
    %v1017 = vadd.f32 %v819, %v1015
    %v1018 = vld [vmem:[#allocation2] sm:$0xff]
    %v1019 = vld [vmem:[#allocation2 + $0x8] sm:$0xf]
    %v1020 = vld [vmem:[%s3] sm:$0xf]
    %1022 = vset.pattern.permute.xlu0 2
    %1023 = vperm.xlu0 %1022, %v1020
    %v1024 = vpop.permute.xlu0 %1023
    %v1028 = vcombine.high %v1018, %v1018
    %1029 = vrot.lane.b32.xlu0 %v1018, 49
    %v1030 = vpop.permute.xlu0 %1029
    %1031 = vrot.lane.b32.xlu0 %v1028, 49
    %v1032 = vpop.permute.xlu0 %1031
    %1033 = vrot.lane.b32.xlu0 %v1019, 49
    %v1034 = vpop.permute.xlu0 %1033
    %vm1035 = vcmask 400384
    %v1036 = vsel %vm1035, %v1030, %v1032
    %v1037 = vsel %vm1035, %v1032, %v1034
    %v1040 = vmul.f32 %v1024, %v1036
    %v1041 = vmul.f32 %v1024, %v1037
    %v1042 = vadd.f32 %v1040, 0.0
    %v1043 = vadd.f32 %v1041, 0.0
    %v1044 = vld [vmem:[#allocation2] sm:$0xff]
    %v1045 = vld [vmem:[#allocation2 + $0x8] sm:$0xf]
    %v1046 = vld [vmem:[%s3] sm:$0xf]
    %1048 = vset.pattern.permute.xlu0 9
    %1049 = vperm.xlu0 %1048, %v1046
    %v1050 = vpop.permute.xlu0 %1049
    %v1054 = vcombine.high %v1044, %v1044
    %1055 = vrot.lane.b32.xlu0 %v1044, 33
    %v1056 = vpop.permute.xlu0 %1055
    %1057 = vrot.lane.b32.xlu0 %v1054, 33
    %v1058 = vpop.permute.xlu0 %1057
    %1059 = vrot.lane.b32.xlu0 %v1045, 33
    %v1060 = vpop.permute.xlu0 %1059
    %vm1061 = vcmask 269312
    %v1062 = vsel %vm1061, %v1056, %v1058
    %v1063 = vsel %vm1061, %v1058, %v1060
    %v1066 = vmul.f32 %v1050, %v1062
    %v1067 = vmul.f32 %v1050, %v1063
    %v1068 = vadd.f32 %v1042, %v1066
    %v1069 = vadd.f32 %v1043, %v1067
    %v1070 = vld [vmem:[#allocation2] sm:$0xff]
    %v1071 = vld [vmem:[#allocation2 + $0x8] sm:$0xf]
    %v1072 = vld [vmem:[%s3] sm:$0xf]
    %1074 = vset.pattern.permute.xlu0 16
    %1075 = vperm.xlu0 %1074, %v1072
    %v1076 = vpop.permute.xlu0 %1075
    %v1080 = vcombine.high %v1070, %v1070
    %1081 = vrot.lane.b32.xlu0 %v1070, 17
    %v1082 = vpop.permute.xlu0 %1081
    %1083 = vrot.lane.b32.xlu0 %v1080, 17
    %v1084 = vpop.permute.xlu0 %1083
    %1085 = vrot.lane.b32.xlu0 %v1071, 17
    %v1086 = vpop.permute.xlu0 %1085
    %vm1087 = vcmask 138240
    %v1088 = vsel %vm1087, %v1082, %v1084
    %v1089 = vsel %vm1087, %v1084, %v1086
    %v1092 = vmul.f32 %v1076, %v1088
    %v1093 = vmul.f32 %v1076, %v1089
    %v1094 = vadd.f32 %v1068, %v1092
    %v1095 = vadd.f32 %v1069, %v1093
    %v1096 = vld [vmem:[#allocation2] sm:$0xff]
    %v1097 = vld [vmem:[#allocation2 + $0x8] sm:$0xf]
    %v1098 = vld [vmem:[%s3] sm:$0xf]
    %1100 = vset.pattern.permute.xlu0 23
    %1101 = vperm.xlu0 %1100, %v1098
    %v1102 = vpop.permute.xlu0 %1101
    %v1106 = vcombine.high %v1096, %v1096
    %1107 = vrot.lane.b32.xlu0 %v1096, 1
    %v1108 = vpop.permute.xlu0 %1107
    %1109 = vrot.lane.b32.xlu0 %v1106, 1
    %v1110 = vpop.permute.xlu0 %1109
    %1111 = vrot.lane.b32.xlu0 %v1097, 1
    %v1112 = vpop.permute.xlu0 %1111
    %vm1113 = vcmask 7168
    %v1114 = vsel %vm1113, %v1108, %v1110
    %v1115 = vsel %vm1113, %v1110, %v1112
    %v1118 = vmul.f32 %v1102, %v1114
    %v1119 = vmul.f32 %v1102, %v1115
    %v1120 = vadd.f32 %v1094, %v1118
    %v1121 = vadd.f32 %v1095, %v1119
    %v1122 = vld [vmem:[#allocation2 + $0x4] sm:$0xff]
    %v1123 = vld [vmem:[#allocation2 + $0xc] sm:$0xf]
    %v1124 = vld [vmem:[%s3] sm:$0xf]
    %1126 = vset.pattern.permute.xlu0 30
    %1127 = vperm.xlu0 %1126, %v1124
    %v1128 = vpop.permute.xlu0 %1127
    %v1132 = vcombine.high %v1122, %v1122
    %1133 = vrot.lane.b32.xlu0 %v1122, 113
    %v1134 = vpop.permute.xlu0 %1133
    %1135 = vrot.lane.b32.xlu0 %v1132, 113
    %v1136 = vpop.permute.xlu0 %1135
    %1137 = vrot.lane.b32.xlu0 %v1123, 113
    %v1138 = vpop.permute.xlu0 %1137
    %vm1139 = vcmask 924672
    %v1140 = vsel %vm1139, %v1134, %v1136
    %v1141 = vsel %vm1139, %v1136, %v1138
    %v1144 = vmul.f32 %v1128, %v1140
    %v1145 = vmul.f32 %v1128, %v1141
    %v1146 = vadd.f32 %v1120, %v1144
    %v1147 = vadd.f32 %v1121, %v1145
    %v1148 = vld [vmem:[#allocation2 + $0x4] sm:$0xff]
    %v1149 = vld [vmem:[#allocation2 + $0xc] sm:$0xf]
    %v1150 = vld [vmem:[%s3] sm:$0xf]
    %1152 = vset.pattern.permute.xlu0 37
    %1153 = vperm.xlu0 %1152, %v1150
    %v1154 = vpop.permute.xlu0 %1153
    %v1158 = vcombine.high %v1148, %v1148
    %1159 = vrot.lane.b32.xlu0 %v1148, 97
    %v1160 = vpop.permute.xlu0 %1159
    %1161 = vrot.lane.b32.xlu0 %v1158, 97
    %v1162 = vpop.permute.xlu0 %1161
    %1163 = vrot.lane.b32.xlu0 %v1149, 97
    %v1164 = vpop.permute.xlu0 %1163
    %vm1165 = vcmask 793600
    %v1166 = vsel %vm1165, %v1160, %v1162
    %v1167 = vsel %vm1165, %v1162, %v1164
    %v1170 = vmul.f32 %v1154, %v1166
    %v1171 = vmul.f32 %v1154, %v1167
    %v1172 = vadd.f32 %v1146, %v1170
    %v1173 = vadd.f32 %v1147, %v1171
    %v1174 = vld [vmem:[#allocation2 + $0x4] sm:$0xff]
    %v1175 = vld [vmem:[#allocation2 + $0xc] sm:$0xf]
    %v1176 = vld [vmem:[%s3] sm:$0xf]
    %1178 = vset.pattern.permute.xlu0 44
    %1179 = vperm.xlu0 %1178, %v1176
    %v1180 = vpop.permute.xlu0 %1179
    %v1184 = vcombine.high %v1174, %v1174
    %1185 = vrot.lane.b32.xlu0 %v1174, 81
    %v1186 = vpop.permute.xlu0 %1185
    %1187 = vrot.lane.b32.xlu0 %v1184, 81
    %v1188 = vpop.permute.xlu0 %1187
    %1189 = vrot.lane.b32.xlu0 %v1175, 81
    %v1190 = vpop.permute.xlu0 %1189
    %vm1191 = vcmask 662528
    %v1192 = vsel %vm1191, %v1186, %v1188
    %v1193 = vsel %vm1191, %v1188, %v1190
    %v1196 = vmul.f32 %v1180, %v1192
    %v1197 = vmul.f32 %v1180, %v1193
    %v1198 = vadd.f32 %v1172, %v1196
    %v1199 = vadd.f32 %v1173, %v1197
    %s1200 = scalar_lea.vmem %s4, 2
    %v1201 = vld [vmem:[%s1200] ss:$8 sm:$0x3]
    %v1203 = vlaneseq
    %v1204 = vshrl.u32 %v1203, 7
    %v1205 = vsub.s32 0, %v1204
    %v1206 = vrot.slane %v1201, %v1205
    %v1207 = vlaneseq
    %v1208 = vshrl.u32 %v1207, 7
    %v1209 = vsub.s32 1, %v1208
    %v1210 = vrot.slane %v1201, %v1209
    %v1213 = vmul.f32 %v1198, %v1206
    %v1214 = vmul.f32 %v1199, %v1210
    %v1215 = vadd.f32 %v1016, %v1213
    %v1216 = vadd.f32 %v1017, %v1214
    %v1217 = vld [vmem:[#allocation2] sm:$0xff]
    %v1218 = vld [vmem:[#allocation2 + $0x8] sm:$0xf]
    %v1219 = vld [vmem:[%s3] sm:$0xf]
    %1221 = vset.pattern.permute.xlu0 3
    %1222 = vperm.xlu0 %1221, %v1219
    %v1223 = vpop.permute.xlu0 %1222
    %v1227 = vcombine.high %v1217, %v1217
    %1228 = vrot.lane.b32.xlu0 %v1217, 48
    %v1229 = vpop.permute.xlu0 %1228
    %1230 = vrot.lane.b32.xlu0 %v1227, 48
    %v1231 = vpop.permute.xlu0 %1230
    %1232 = vrot.lane.b32.xlu0 %v1218, 48
    %v1233 = vpop.permute.xlu0 %1232
    %vm1234 = vcmask 392192
    %v1235 = vsel %vm1234, %v1229, %v1231
    %v1236 = vsel %vm1234, %v1231, %v1233
    %v1239 = vmul.f32 %v1223, %v1235
    %v1240 = vmul.f32 %v1223, %v1236
    %v1241 = vadd.f32 %v1239, 0.0
    %v1242 = vadd.f32 %v1240, 0.0
    %v1243 = vld [vmem:[#allocation2] sm:$0xff]
    %v1244 = vld [vmem:[#allocation2 + $0x8] sm:$0xf]
    %v1245 = vld [vmem:[%s3] sm:$0xf]
    %1247 = vset.pattern.permute.xlu0 10
    %1248 = vperm.xlu0 %1247, %v1245
    %v1249 = vpop.permute.xlu0 %1248
    %v1253 = vcombine.high %v1243, %v1243
    %1254 = vrot.lane.b32.xlu0 %v1243, 32
    %v1255 = vpop.permute.xlu0 %1254
    %1256 = vrot.lane.b32.xlu0 %v1253, 32
    %v1257 = vpop.permute.xlu0 %1256
    %1258 = vrot.lane.b32.xlu0 %v1244, 32
    %v1259 = vpop.permute.xlu0 %1258
    %vm1260 = vcmask 261120
    %v1261 = vsel %vm1260, %v1255, %v1257
    %v1262 = vsel %vm1260, %v1257, %v1259
    %v1265 = vmul.f32 %v1249, %v1261
    %v1266 = vmul.f32 %v1249, %v1262
    %v1267 = vadd.f32 %v1241, %v1265
    %v1268 = vadd.f32 %v1242, %v1266
    %v1269 = vld [vmem:[#allocation2] sm:$0xff]
    %v1270 = vld [vmem:[#allocation2 + $0x8] sm:$0xf]
    %v1271 = vld [vmem:[%s3] sm:$0xf]
    %1273 = vset.pattern.permute.xlu0 17
    %1274 = vperm.xlu0 %1273, %v1271
    %v1275 = vpop.permute.xlu0 %1274
    %v1279 = vcombine.high %v1269, %v1269
    %1280 = vrot.lane.b32.xlu0 %v1269, 16
    %v1281 = vpop.permute.xlu0 %1280
    %1282 = vrot.lane.b32.xlu0 %v1279, 16
    %v1283 = vpop.permute.xlu0 %1282
    %1284 = vrot.lane.b32.xlu0 %v1270, 16
    %v1285 = vpop.permute.xlu0 %1284
    %vm1286 = vcmask 130048
    %v1287 = vsel %vm1286, %v1281, %v1283
    %v1288 = vsel %vm1286, %v1283, %v1285
    %v1291 = vmul.f32 %v1275, %v1287
    %v1292 = vmul.f32 %v1275, %v1288
    %v1293 = vadd.f32 %v1267, %v1291
    %v1294 = vadd.f32 %v1268, %v1292
    %v1295 = vld [vmem:[#allocation2 + $0x4] sm:$0xff]
    %v1296 = vld [vmem:[%s3] sm:$0xf]
    %1298 = vset.pattern.permute.xlu0 24
    %1299 = vperm.xlu0 %1298, %v1296
    %v1300 = vpop.permute.xlu0 %1299
    %v1303 = vcombine.high %v1295, %v1295
    %v1305 = vmul.f32 %v1300, %v1295
    %v1306 = vmul.f32 %v1300, %v1303
    %v1307 = vadd.f32 %v1293, %v1305
    %v1308 = vadd.f32 %v1294, %v1306
    %v1309 = vld [vmem:[#allocation2 + $0x4] sm:$0xff]
    %v1310 = vld [vmem:[#allocation2 + $0xc] sm:$0xf]
    %v1311 = vld [vmem:[%s3] sm:$0xf]
    %1313 = vset.pattern.permute.xlu0 31
    %1314 = vperm.xlu0 %1313, %v1311
    %v1315 = vpop.permute.xlu0 %1314
    %v1319 = vcombine.high %v1309, %v1309
    %1320 = vrot.lane.b32.xlu0 %v1309, 112
    %v1321 = vpop.permute.xlu0 %1320
    %1322 = vrot.lane.b32.xlu0 %v1319, 112
    %v1323 = vpop.permute.xlu0 %1322
    %1324 = vrot.lane.b32.xlu0 %v1310, 112
    %v1325 = vpop.permute.xlu0 %1324
    %vm1326 = vcmask 916480
    %v1327 = vsel %vm1326, %v1321, %v1323
    %v1328 = vsel %vm1326, %v1323, %v1325
    %v1331 = vmul.f32 %v1315, %v1327
    %v1332 = vmul.f32 %v1315, %v1328
    %v1333 = vadd.f32 %v1307, %v1331
    %v1334 = vadd.f32 %v1308, %v1332
    %v1335 = vld [vmem:[#allocation2 + $0x4] sm:$0xff]
    %v1336 = vld [vmem:[#allocation2 + $0xc] sm:$0xf]
    %v1337 = vld [vmem:[%s3] sm:$0xf]
    %1339 = vset.pattern.permute.xlu0 38
    %1340 = vperm.xlu0 %1339, %v1337
    %v1341 = vpop.permute.xlu0 %1340
    %v1345 = vcombine.high %v1335, %v1335
    %1346 = vrot.lane.b32.xlu0 %v1335, 96
    %v1347 = vpop.permute.xlu0 %1346
    %1348 = vrot.lane.b32.xlu0 %v1345, 96
    %v1349 = vpop.permute.xlu0 %1348
    %1350 = vrot.lane.b32.xlu0 %v1336, 96
    %v1351 = vpop.permute.xlu0 %1350
    %vm1352 = vcmask 785408
    %v1353 = vsel %vm1352, %v1347, %v1349
    %v1354 = vsel %vm1352, %v1349, %v1351
    %v1357 = vmul.f32 %v1341, %v1353
    %v1358 = vmul.f32 %v1341, %v1354
    %v1359 = vadd.f32 %v1333, %v1357
    %v1360 = vadd.f32 %v1334, %v1358
    %v1361 = vld [vmem:[#allocation2 + $0x4] sm:$0xff]
    %v1362 = vld [vmem:[#allocation2 + $0xc] sm:$0xf]
    %v1363 = vld [vmem:[%s3] sm:$0xf]
    %1365 = vset.pattern.permute.xlu0 45
    %1366 = vperm.xlu0 %1365, %v1363
    %v1367 = vpop.permute.xlu0 %1366
    %v1371 = vcombine.high %v1361, %v1361
    %1372 = vrot.lane.b32.xlu0 %v1361, 80
    %v1373 = vpop.permute.xlu0 %1372
    %1374 = vrot.lane.b32.xlu0 %v1371, 80
    %v1375 = vpop.permute.xlu0 %1374
    %1376 = vrot.lane.b32.xlu0 %v1362, 80
    %v1377 = vpop.permute.xlu0 %1376
    %vm1378 = vcmask 654336
    %v1379 = vsel %vm1378, %v1373, %v1375
    %v1380 = vsel %vm1378, %v1375, %v1377
    %v1383 = vmul.f32 %v1367, %v1379
    %v1384 = vmul.f32 %v1367, %v1380
    %v1385 = vadd.f32 %v1359, %v1383
    %v1386 = vadd.f32 %v1360, %v1384
    %s1387 = scalar_lea.vmem %s4, 3
    %v1388 = vld [vmem:[%s1387] ss:$8 sm:$0x3]
    %v1390 = vlaneseq
    %v1391 = vshrl.u32 %v1390, 7
    %v1392 = vsub.s32 0, %v1391
    %v1393 = vrot.slane %v1388, %v1392
    %v1394 = vlaneseq
    %v1395 = vshrl.u32 %v1394, 7
    %v1396 = vsub.s32 1, %v1395
    %v1397 = vrot.slane %v1388, %v1396
    %v1400 = vmul.f32 %v1385, %v1393
    %v1401 = vmul.f32 %v1386, %v1397
    %v1402 = vadd.f32 %v1215, %v1400
    %v1403 = vadd.f32 %v1216, %v1401
    %v1404 = vld [vmem:[#allocation2] sm:$0xff]
    %v1405 = vld [vmem:[#allocation2 + $0x8] sm:$0xf]
    %v1406 = vld [vmem:[%s3] sm:$0xf]
    %1408 = vset.pattern.permute.xlu0 4
    %1409 = vperm.xlu0 %1408, %v1406
    %v1410 = vpop.permute.xlu0 %1409
    %v1414 = vcombine.high %v1404, %v1404
    %1415 = vrot.lane.b32.xlu0 %v1404, 47
    %v1416 = vpop.permute.xlu0 %1415
    %1417 = vrot.lane.b32.xlu0 %v1414, 47
    %v1418 = vpop.permute.xlu0 %1417
    %1419 = vrot.lane.b32.xlu0 %v1405, 47
    %v1420 = vpop.permute.xlu0 %1419
    %vm1421 = vcmask 384000
    %v1422 = vsel %vm1421, %v1416, %v1418
    %v1423 = vsel %vm1421, %v1418, %v1420
    %v1426 = vmul.f32 %v1410, %v1422
    %v1427 = vmul.f32 %v1410, %v1423
    %v1428 = vadd.f32 %v1426, 0.0
    %v1429 = vadd.f32 %v1427, 0.0
    %v1430 = vld [vmem:[#allocation2] sm:$0xff]
    %v1431 = vld [vmem:[#allocation2 + $0x8] sm:$0xf]
    %v1432 = vld [vmem:[%s3] sm:$0xf]
    %1434 = vset.pattern.permute.xlu0 11
    %1435 = vperm.xlu0 %1434, %v1432
    %v1436 = vpop.permute.xlu0 %1435
    %v1440 = vcombine.high %v1430, %v1430
    %1441 = vrot.lane.b32.xlu0 %v1430, 31
    %v1442 = vpop.permute.xlu0 %1441
    %1443 = vrot.lane.b32.xlu0 %v1440, 31
    %v1444 = vpop.permute.xlu0 %1443
    %1445 = vrot.lane.b32.xlu0 %v1431, 31
    %v1446 = vpop.permute.xlu0 %1445
    %vm1447 = vcmask 252928
    %v1448 = vsel %vm1447, %v1442, %v1444
    %v1449 = vsel %vm1447, %v1444, %v1446
    %v1452 = vmul.f32 %v1436, %v1448
    %v1453 = vmul.f32 %v1436, %v1449
    %v1454 = vadd.f32 %v1428, %v1452
    %v1455 = vadd.f32 %v1429, %v1453
    %v1456 = vld [vmem:[#allocation2] sm:$0xff]
    %v1457 = vld [vmem:[#allocation2 + $0x8] sm:$0xf]
    %v1458 = vld [vmem:[%s3] sm:$0xf]
    %1460 = vset.pattern.permute.xlu0 18
    %1461 = vperm.xlu0 %1460, %v1458
    %v1462 = vpop.permute.xlu0 %1461
    %v1466 = vcombine.high %v1456, %v1456
    %1467 = vrot.lane.b32.xlu0 %v1456, 15
    %v1468 = vpop.permute.xlu0 %1467
    %1469 = vrot.lane.b32.xlu0 %v1466, 15
    %v1470 = vpop.permute.xlu0 %1469
    %1471 = vrot.lane.b32.xlu0 %v1457, 15
    %v1472 = vpop.permute.xlu0 %1471
    %vm1473 = vcmask 121856
    %v1474 = vsel %vm1473, %v1468, %v1470
    %v1475 = vsel %vm1473, %v1470, %v1472
    %v1478 = vmul.f32 %v1462, %v1474
    %v1479 = vmul.f32 %v1462, %v1475
    %v1480 = vadd.f32 %v1454, %v1478
    %v1481 = vadd.f32 %v1455, %v1479
    %v1482 = vld [vmem:[#allocation2 + $0x4] sm:$0xff]
    %v1483 = vld [vmem:[#allocation2 + $0xc] sm:$0xf]
    %v1484 = vld [vmem:[%s3] sm:$0xf]
    %1486 = vset.pattern.permute.xlu0 25
    %1487 = vperm.xlu0 %1486, %v1484
    %v1488 = vpop.permute.xlu0 %1487
    %v1492 = vcombine.high %v1482, %v1482
    %1493 = vrot.lane.b32.xlu0 %v1482, 127
    %v1494 = vpop.permute.xlu0 %1493
    %1495 = vrot.lane.b32.xlu0 %v1492, 127
    %v1496 = vpop.permute.xlu0 %1495
    %1497 = vrot.lane.b32.xlu0 %v1483, 127
    %v1498 = vpop.permute.xlu0 %1497
    %vm1499 = vcmask 1039360
    %v1500 = vsel %vm1499, %v1494, %v1496
    %v1501 = vsel %vm1499, %v1496, %v1498
    %v1504 = vmul.f32 %v1488, %v1500
    %v1505 = vmul.f32 %v1488, %v1501
    %v1506 = vadd.f32 %v1480, %v1504
    %v1507 = vadd.f32 %v1481, %v1505
    %v1508 = vld [vmem:[#allocation2 + $0x4] sm:$0xff]
    %v1509 = vld [vmem:[#allocation2 + $0xc] sm:$0xf]
    %v1510 = vld [vmem:[%s3] sm:$0xf]
    %1512 = vset.pattern.permute.xlu0 32
    %1513 = vperm.xlu0 %1512, %v1510
    %v1514 = vpop.permute.xlu0 %1513
    %v1518 = vcombine.high %v1508, %v1508
    %1519 = vrot.lane.b32.xlu0 %v1508, 111
    %v1520 = vpop.permute.xlu0 %1519
    %1521 = vrot.lane.b32.xlu0 %v1518, 111
    %v1522 = vpop.permute.xlu0 %1521
    %1523 = vrot.lane.b32.xlu0 %v1509, 111
    %v1524 = vpop.permute.xlu0 %1523
    %vm1525 = vcmask 908288
    %v1526 = vsel %vm1525, %v1520, %v1522
    %v1527 = vsel %vm1525, %v1522, %v1524
    %v1530 = vmul.f32 %v1514, %v1526
    %v1531 = vmul.f32 %v1514, %v1527
    %v1532 = vadd.f32 %v1506, %v1530
    %v1533 = vadd.f32 %v1507, %v1531
    %v1534 = vld [vmem:[#allocation2 + $0x4] sm:$0xff]
    %v1535 = vld [vmem:[#allocation2 + $0xc] sm:$0xf]
    %v1536 = vld [vmem:[%s3] sm:$0xf]
    %1538 = vset.pattern.permute.xlu0 39
    %1539 = vperm.xlu0 %1538, %v1536
    %v1540 = vpop.permute.xlu0 %1539
    %v1544 = vcombine.high %v1534, %v1534
    %1545 = vrot.lane.b32.xlu0 %v1534, 95
    %v1546 = vpop.permute.xlu0 %1545
    %1547 = vrot.lane.b32.xlu0 %v1544, 95
    %v1548 = vpop.permute.xlu0 %1547
    %1549 = vrot.lane.b32.xlu0 %v1535, 95
    %v1550 = vpop.permute.xlu0 %1549
    %vm1551 = vcmask 777216
    %v1552 = vsel %vm1551, %v1546, %v1548
    %v1553 = vsel %vm1551, %v1548, %v1550
    %v1556 = vmul.f32 %v1540, %v1552
    %v1557 = vmul.f32 %v1540, %v1553
    %v1558 = vadd.f32 %v1532, %v1556
    %v1559 = vadd.f32 %v1533, %v1557
    %v1560 = vld [vmem:[#allocation2 + $0x4] sm:$0xff]
    %v1561 = vld [vmem:[#allocation2 + $0xc] sm:$0xf]
    %v1562 = vld [vmem:[%s3] sm:$0xf]
    %1564 = vset.pattern.permute.xlu0 46
    %1565 = vperm.xlu0 %1564, %v1562
    %v1566 = vpop.permute.xlu0 %1565
    %v1570 = vcombine.high %v1560, %v1560
    %1571 = vrot.lane.b32.xlu0 %v1560, 79
    %v1572 = vpop.permute.xlu0 %1571
    %1573 = vrot.lane.b32.xlu0 %v1570, 79
    %v1574 = vpop.permute.xlu0 %1573
    %1575 = vrot.lane.b32.xlu0 %v1561, 79
    %v1576 = vpop.permute.xlu0 %1575
    %vm1577 = vcmask 646144
    %v1578 = vsel %vm1577, %v1572, %v1574
    %v1579 = vsel %vm1577, %v1574, %v1576
    %v1582 = vmul.f32 %v1566, %v1578
    %v1583 = vmul.f32 %v1566, %v1579
    %v1584 = vadd.f32 %v1558, %v1582
    %v1585 = vadd.f32 %v1559, %v1583
    %s1586 = scalar_lea.vmem %s4, 4
    %v1587 = vld [vmem:[%s1586] ss:$8 sm:$0x3]
    %v1589 = vlaneseq
    %v1590 = vshrl.u32 %v1589, 7
    %v1591 = vsub.s32 0, %v1590
    %v1592 = vrot.slane %v1587, %v1591
    %v1593 = vlaneseq
    %v1594 = vshrl.u32 %v1593, 7
    %v1595 = vsub.s32 1, %v1594
    %v1596 = vrot.slane %v1587, %v1595
    %v1599 = vmul.f32 %v1584, %v1592
    %v1600 = vmul.f32 %v1585, %v1596
    %v1601 = vadd.f32 %v1402, %v1599
    %v1602 = vadd.f32 %v1403, %v1600
    %v1603 = vld [vmem:[#allocation2] sm:$0xff]
    %v1604 = vld [vmem:[#allocation2 + $0x8] sm:$0xf]
    %v1605 = vld [vmem:[%s3] sm:$0xf]
    %1607 = vset.pattern.permute.xlu0 5
    %1608 = vperm.xlu0 %1607, %v1605
    %v1609 = vpop.permute.xlu0 %1608
    %v1613 = vcombine.high %v1603, %v1603
    %1614 = vrot.lane.b32.xlu0 %v1603, 46
    %v1615 = vpop.permute.xlu0 %1614
    %1616 = vrot.lane.b32.xlu0 %v1613, 46
    %v1617 = vpop.permute.xlu0 %1616
    %1618 = vrot.lane.b32.xlu0 %v1604, 46
    %v1619 = vpop.permute.xlu0 %1618
    %vm1620 = vcmask 375808
    %v1621 = vsel %vm1620, %v1615, %v1617
    %v1622 = vsel %vm1620, %v1617, %v1619
    %v1625 = vmul.f32 %v1609, %v1621
    %v1626 = vmul.f32 %v1609, %v1622
    %v1627 = vadd.f32 %v1625, 0.0
    %v1628 = vadd.f32 %v1626, 0.0
    %v1629 = vld [vmem:[#allocation2] sm:$0xff]
    %v1630 = vld [vmem:[#allocation2 + $0x8] sm:$0xf]
    %v1631 = vld [vmem:[%s3] sm:$0xf]
    %1633 = vset.pattern.permute.xlu0 12
    %1634 = vperm.xlu0 %1633, %v1631
    %v1635 = vpop.permute.xlu0 %1634
    %v1639 = vcombine.high %v1629, %v1629
    %1640 = vrot.lane.b32.xlu0 %v1629, 30
    %v1641 = vpop.permute.xlu0 %1640
    %1642 = vrot.lane.b32.xlu0 %v1639, 30
    %v1643 = vpop.permute.xlu0 %1642
    %1644 = vrot.lane.b32.xlu0 %v1630, 30
    %v1645 = vpop.permute.xlu0 %1644
    %vm1646 = vcmask 244736
    %v1647 = vsel %vm1646, %v1641, %v1643
    %v1648 = vsel %vm1646, %v1643, %v1645
    %v1651 = vmul.f32 %v1635, %v1647
    %v1652 = vmul.f32 %v1635, %v1648
    %v1653 = vadd.f32 %v1627, %v1651
    %v1654 = vadd.f32 %v1628, %v1652
    %v1655 = vld [vmem:[#allocation2] sm:$0xff]
    %v1656 = vld [vmem:[#allocation2 + $0x8] sm:$0xf]
    %v1657 = vld [vmem:[%s3] sm:$0xf]
    %1659 = vset.pattern.permute.xlu0 19
    %1660 = vperm.xlu0 %1659, %v1657
    %v1661 = vpop.permute.xlu0 %1660
    %v1665 = vcombine.high %v1655, %v1655
    %1666 = vrot.lane.b32.xlu0 %v1655, 14
    %v1667 = vpop.permute.xlu0 %1666
    %1668 = vrot.lane.b32.xlu0 %v1665, 14
    %v1669 = vpop.permute.xlu0 %1668
    %1670 = vrot.lane.b32.xlu0 %v1656, 14
    %v1671 = vpop.permute.xlu0 %1670
    %vm1672 = vcmask 113664
    %v1673 = vsel %vm1672, %v1667, %v1669
    %v1674 = vsel %vm1672, %v1669, %v1671
    %v1677 = vmul.f32 %v1661, %v1673
    %v1678 = vmul.f32 %v1661, %v1674
    %v1679 = vadd.f32 %v1653, %v1677
    %v1680 = vadd.f32 %v1654, %v1678
    %v1681 = vld [vmem:[#allocation2 + $0x4] sm:$0xff]
    %v1682 = vld [vmem:[#allocation2 + $0xc] sm:$0xf]
    %v1683 = vld [vmem:[%s3] sm:$0xf]
    %1685 = vset.pattern.permute.xlu0 26
    %1686 = vperm.xlu0 %1685, %v1683
    %v1687 = vpop.permute.xlu0 %1686
    %v1691 = vcombine.high %v1681, %v1681
    %1692 = vrot.lane.b32.xlu0 %v1681, 126
    %v1693 = vpop.permute.xlu0 %1692
    %1694 = vrot.lane.b32.xlu0 %v1691, 126
    %v1695 = vpop.permute.xlu0 %1694
    %1696 = vrot.lane.b32.xlu0 %v1682, 126
    %v1697 = vpop.permute.xlu0 %1696
    %vm1698 = vcmask 1031168
    %v1699 = vsel %vm1698, %v1693, %v1695
    %v1700 = vsel %vm1698, %v1695, %v1697
    %v1703 = vmul.f32 %v1687, %v1699
    %v1704 = vmul.f32 %v1687, %v1700
    %v1705 = vadd.f32 %v1679, %v1703
    %v1706 = vadd.f32 %v1680, %v1704
    %v1707 = vld [vmem:[#allocation2 + $0x4] sm:$0xff]
    %v1708 = vld [vmem:[#allocation2 + $0xc] sm:$0xf]
    %v1709 = vld [vmem:[%s3] sm:$0xf]
    %1711 = vset.pattern.permute.xlu0 33
    %1712 = vperm.xlu0 %1711, %v1709
    %v1713 = vpop.permute.xlu0 %1712
    %v1717 = vcombine.high %v1707, %v1707
    %1718 = vrot.lane.b32.xlu0 %v1707, 110
    %v1719 = vpop.permute.xlu0 %1718
    %1720 = vrot.lane.b32.xlu0 %v1717, 110
    %v1721 = vpop.permute.xlu0 %1720
    %1722 = vrot.lane.b32.xlu0 %v1708, 110
    %v1723 = vpop.permute.xlu0 %1722
    %vm1724 = vcmask 900096
    %v1725 = vsel %vm1724, %v1719, %v1721
    %v1726 = vsel %vm1724, %v1721, %v1723
    %v1729 = vmul.f32 %v1713, %v1725
    %v1730 = vmul.f32 %v1713, %v1726
    %v1731 = vadd.f32 %v1705, %v1729
    %v1732 = vadd.f32 %v1706, %v1730
    %v1733 = vld [vmem:[#allocation2 + $0x4] sm:$0xff]
    %v1734 = vld [vmem:[#allocation2 + $0xc] sm:$0xf]
    %v1735 = vld [vmem:[%s3] sm:$0xf]
    %1737 = vset.pattern.permute.xlu0 40
    %1738 = vperm.xlu0 %1737, %v1735
    %v1739 = vpop.permute.xlu0 %1738
    %v1743 = vcombine.high %v1733, %v1733
    %1744 = vrot.lane.b32.xlu0 %v1733, 94
    %v1745 = vpop.permute.xlu0 %1744
    %1746 = vrot.lane.b32.xlu0 %v1743, 94
    %v1747 = vpop.permute.xlu0 %1746
    %1748 = vrot.lane.b32.xlu0 %v1734, 94
    %v1749 = vpop.permute.xlu0 %1748
    %vm1750 = vcmask 769024
    %v1751 = vsel %vm1750, %v1745, %v1747
    %v1752 = vsel %vm1750, %v1747, %v1749
    %v1755 = vmul.f32 %v1739, %v1751
    %v1756 = vmul.f32 %v1739, %v1752
    %v1757 = vadd.f32 %v1731, %v1755
    %v1758 = vadd.f32 %v1732, %v1756
    %v1759 = vld [vmem:[#allocation2 + $0x4] sm:$0xff]
    %v1760 = vld [vmem:[#allocation2 + $0xc] sm:$0xf]
    %v1761 = vld [vmem:[%s3] sm:$0xf]
    %1763 = vset.pattern.permute.xlu0 47
    %1764 = vperm.xlu0 %1763, %v1761
    %v1765 = vpop.permute.xlu0 %1764
    %v1769 = vcombine.high %v1759, %v1759
    %1770 = vrot.lane.b32.xlu0 %v1759, 78
    %v1771 = vpop.permute.xlu0 %1770
    %1772 = vrot.lane.b32.xlu0 %v1769, 78
    %v1773 = vpop.permute.xlu0 %1772
    %1774 = vrot.lane.b32.xlu0 %v1760, 78
    %v1775 = vpop.permute.xlu0 %1774
    %vm1776 = vcmask 637952
    %v1777 = vsel %vm1776, %v1771, %v1773
    %v1778 = vsel %vm1776, %v1773, %v1775
    %v1781 = vmul.f32 %v1765, %v1777
    %v1782 = vmul.f32 %v1765, %v1778
    %v1783 = vadd.f32 %v1757, %v1781
    %v1784 = vadd.f32 %v1758, %v1782
    %s1785 = scalar_lea.vmem %s4, 5
    %v1786 = vld [vmem:[%s1785] ss:$8 sm:$0x3]
    %v1788 = vlaneseq
    %v1789 = vshrl.u32 %v1788, 7
    %v1790 = vsub.s32 0, %v1789
    %v1791 = vrot.slane %v1786, %v1790
    %v1792 = vlaneseq
    %v1793 = vshrl.u32 %v1792, 7
    %v1794 = vsub.s32 1, %v1793
    %v1795 = vrot.slane %v1786, %v1794
    %v1798 = vmul.f32 %v1783, %v1791
    %v1799 = vmul.f32 %v1784, %v1795
    %v1800 = vadd.f32 %v1601, %v1798
    %v1801 = vadd.f32 %v1602, %v1799
    %v1802 = vld [vmem:[#allocation2] sm:$0xff]
    %v1803 = vld [vmem:[#allocation2 + $0x8] sm:$0xf]
    %v1804 = vld [vmem:[%s3] sm:$0xf]
    %1806 = vset.pattern.permute.xlu0 6
    %1807 = vperm.xlu0 %1806, %v1804
    %v1808 = vpop.permute.xlu0 %1807
    %v1812 = vcombine.high %v1802, %v1802
    %1813 = vrot.lane.b32.xlu0 %v1802, 45
    %v1814 = vpop.permute.xlu0 %1813
    %1815 = vrot.lane.b32.xlu0 %v1812, 45
    %v1816 = vpop.permute.xlu0 %1815
    %1817 = vrot.lane.b32.xlu0 %v1803, 45
    %v1818 = vpop.permute.xlu0 %1817
    %vm1819 = vcmask 367616
    %v1820 = vsel %vm1819, %v1814, %v1816
    %v1821 = vsel %vm1819, %v1816, %v1818
    %v1824 = vmul.f32 %v1808, %v1820
    %v1825 = vmul.f32 %v1808, %v1821
    %v1826 = vadd.f32 %v1824, 0.0
    %v1827 = vadd.f32 %v1825, 0.0
    %v1828 = vld [vmem:[#allocation2] sm:$0xff]
    %v1829 = vld [vmem:[#allocation2 + $0x8] sm:$0xf]
    %v1830 = vld [vmem:[%s3] sm:$0xf]
    %1832 = vset.pattern.permute.xlu0 13
    %1833 = vperm.xlu0 %1832, %v1830
    %v1834 = vpop.permute.xlu0 %1833
    %v1838 = vcombine.high %v1828, %v1828
    %1839 = vrot.lane.b32.xlu0 %v1828, 29
    %v1840 = vpop.permute.xlu0 %1839
    %1841 = vrot.lane.b32.xlu0 %v1838, 29
    %v1842 = vpop.permute.xlu0 %1841
    %1843 = vrot.lane.b32.xlu0 %v1829, 29
    %v1844 = vpop.permute.xlu0 %1843
    %vm1845 = vcmask 236544
    %v1846 = vsel %vm1845, %v1840, %v1842
    %v1847 = vsel %vm1845, %v1842, %v1844
    %v1850 = vmul.f32 %v1834, %v1846
    %v1851 = vmul.f32 %v1834, %v1847
    %v1852 = vadd.f32 %v1826, %v1850
    %v1853 = vadd.f32 %v1827, %v1851
    %v1854 = vld [vmem:[#allocation2] sm:$0xff]
    %v1855 = vld [vmem:[#allocation2 + $0x8] sm:$0xf]
    %v1856 = vld [vmem:[%s3] sm:$0xf]
    %1858 = vset.pattern.permute.xlu0 20
    %1859 = vperm.xlu0 %1858, %v1856
    %v1860 = vpop.permute.xlu0 %1859
    %v1864 = vcombine.high %v1854, %v1854
    %1865 = vrot.lane.b32.xlu0 %v1854, 13
    %v1866 = vpop.permute.xlu0 %1865
    %1867 = vrot.lane.b32.xlu0 %v1864, 13
    %v1868 = vpop.permute.xlu0 %1867
    %1869 = vrot.lane.b32.xlu0 %v1855, 13
    %v1870 = vpop.permute.xlu0 %1869
    %vm1871 = vcmask 105472
    %v1872 = vsel %vm1871, %v1866, %v1868
    %v1873 = vsel %vm1871, %v1868, %v1870
    %v1876 = vmul.f32 %v1860, %v1872
    %v1877 = vmul.f32 %v1860, %v1873
    %v1878 = vadd.f32 %v1852, %v1876
    %v1879 = vadd.f32 %v1853, %v1877
    %v1880 = vld [vmem:[#allocation2 + $0x4] sm:$0xff]
    %v1881 = vld [vmem:[#allocation2 + $0xc] sm:$0xf]
    %v1882 = vld [vmem:[%s3] sm:$0xf]
    %1884 = vset.pattern.permute.xlu0 27
    %1885 = vperm.xlu0 %1884, %v1882
    %v1886 = vpop.permute.xlu0 %1885
    %v1890 = vcombine.high %v1880, %v1880
    %1891 = vrot.lane.b32.xlu0 %v1880, 125
    %v1892 = vpop.permute.xlu0 %1891
    %1893 = vrot.lane.b32.xlu0 %v1890, 125
    %v1894 = vpop.permute.xlu0 %1893
    %1895 = vrot.lane.b32.xlu0 %v1881, 125
    %v1896 = vpop.permute.xlu0 %1895
    %vm1897 = vcmask 1022976
    %v1898 = vsel %vm1897, %v1892, %v1894
    %v1899 = vsel %vm1897, %v1894, %v1896
    %v1902 = vmul.f32 %v1886, %v1898
    %v1903 = vmul.f32 %v1886, %v1899
    %v1904 = vadd.f32 %v1878, %v1902
    %v1905 = vadd.f32 %v1879, %v1903
    %v1906 = vld [vmem:[#allocation2 + $0x4] sm:$0xff]
    %v1907 = vld [vmem:[#allocation2 + $0xc] sm:$0xf]
    %v1908 = vld [vmem:[%s3] sm:$0xf]
    %1910 = vset.pattern.permute.xlu0 34
    %1911 = vperm.xlu0 %1910, %v1908
    %v1912 = vpop.permute.xlu0 %1911
    %v1916 = vcombine.high %v1906, %v1906
    %1917 = vrot.lane.b32.xlu0 %v1906, 109
    %v1918 = vpop.permute.xlu0 %1917
    %1919 = vrot.lane.b32.xlu0 %v1916, 109
    %v1920 = vpop.permute.xlu0 %1919
    %1921 = vrot.lane.b32.xlu0 %v1907, 109
    %v1922 = vpop.permute.xlu0 %1921
    %vm1923 = vcmask 891904
    %v1924 = vsel %vm1923, %v1918, %v1920
    %v1925 = vsel %vm1923, %v1920, %v1922
    %v1928 = vmul.f32 %v1912, %v1924
    %v1929 = vmul.f32 %v1912, %v1925
    %v1930 = vadd.f32 %v1904, %v1928
    %v1931 = vadd.f32 %v1905, %v1929
    %v1932 = vld [vmem:[#allocation2 + $0x4] sm:$0xff]
    %v1933 = vld [vmem:[#allocation2 + $0xc] sm:$0xf]
    %v1934 = vld [vmem:[%s3] sm:$0xf]
    %1936 = vset.pattern.permute.xlu0 41
    %1937 = vperm.xlu0 %1936, %v1934
    %v1938 = vpop.permute.xlu0 %1937
    %v1942 = vcombine.high %v1932, %v1932
    %1943 = vrot.lane.b32.xlu0 %v1932, 93
    %v1944 = vpop.permute.xlu0 %1943
    %1945 = vrot.lane.b32.xlu0 %v1942, 93
    %v1946 = vpop.permute.xlu0 %1945
    %1947 = vrot.lane.b32.xlu0 %v1933, 93
    %v1948 = vpop.permute.xlu0 %1947
    %vm1949 = vcmask 760832
    %v1950 = vsel %vm1949, %v1944, %v1946
    %v1951 = vsel %vm1949, %v1946, %v1948
    %v1954 = vmul.f32 %v1938, %v1950
    %v1955 = vmul.f32 %v1938, %v1951
    %v1956 = vadd.f32 %v1930, %v1954
    %v1957 = vadd.f32 %v1931, %v1955
    %v1958 = vld [vmem:[#allocation2 + $0x4] sm:$0xff]
    %v1959 = vld [vmem:[#allocation2 + $0xc] sm:$0xf]
    %v1960 = vld [vmem:[%s3] sm:$0xf]
    %1962 = vset.pattern.permute.xlu0 48
    %1963 = vperm.xlu0 %1962, %v1960
    %v1964 = vpop.permute.xlu0 %1963
    %v1968 = vcombine.high %v1958, %v1958
    %1969 = vrot.lane.b32.xlu0 %v1958, 77
    %v1970 = vpop.permute.xlu0 %1969
    %1971 = vrot.lane.b32.xlu0 %v1968, 77
    %v1972 = vpop.permute.xlu0 %1971
    %1973 = vrot.lane.b32.xlu0 %v1959, 77
    %v1974 = vpop.permute.xlu0 %1973
    %vm1975 = vcmask 629760
    %v1976 = vsel %vm1975, %v1970, %v1972
    %v1977 = vsel %vm1975, %v1972, %v1974
    %v1980 = vmul.f32 %v1964, %v1976
    %v1981 = vmul.f32 %v1964, %v1977
    %v1982 = vadd.f32 %v1956, %v1980
    %v1983 = vadd.f32 %v1957, %v1981
    %s1984 = scalar_lea.vmem %s4, 6
    %v1985 = vld [vmem:[%s1984] ss:$8 sm:$0x3]
    %v1987 = vlaneseq
    %v1988 = vshrl.u32 %v1987, 7
    %v1989 = vsub.s32 0, %v1988
    %v1990 = vrot.slane %v1985, %v1989
    %v1991 = vlaneseq
    %v1992 = vshrl.u32 %v1991, 7
    %v1993 = vsub.s32 1, %v1992
    %v1994 = vrot.slane %v1985, %v1993
    %v1997 = vmul.f32 %v1982, %v1990
    %v1998 = vmul.f32 %v1983, %v1994
    %v1999 = vadd.f32 %v1800, %v1997
    %v2000 = vadd.f32 %v1801, %v1998
    %v2003 = vrot.slane %v1999, 2
    %v2004 = vrot.slane %v2000, 2
    %v2007 = vadd.f32 %v1999, %v2003
    %v2008 = vadd.f32 %v2000, %v2004
    %v2009 = vxor.u32 %v2007, 2147483648
    %v2010 = vxor.u32 %v2008, 2147483648
    %v2011 = vmul.f32 %v2009, 1.442695
    %v2012 = vpow.pop %v2011
    %v2013 = vmul.f32 %v2010, 1.442695
    %v2014 = vpow.pop %v2013
    %v2015 = vadd.f32 %v2012, 1.0
    %v2016 = vadd.f32 %v2014, 1.0
    %v2017 = vrcp.pop %v2015
    %v2018 = vmul.f32 1.0, %v2017
    %v2019 = vrcp.pop %v2016
    %v2020 = vmul.f32 1.0, %v2019
    %v2021 = vlaneseq
    %v2022 = vshrl.u32 %v2021, 7
    %v2023 = vsub.s32 0, %v2022
    %v2024 = vrot.slane %v2018, %v2023
    %v2025 = vlaneseq
    %v2026 = vshrl.u32 %v2025, 7
    %v2027 = vsub.s32 0, %v2026
    %v2028 = vrot.slane %v2020, %v2027
    %v2029 = vmul.f32 %v243, %v2024
    %v2030 = vmul.f32 %v244, %v2028
    %v2031 = vmul.f32 %v245, %v2024
    %v2032 = vmul.f32 %v246, %v2028
    %v2033 = vmul.f32 %v247, %v2024
    %v2034 = vmul.f32 %v248, %v2028
    %v2035 = vmul.f32 %v249, %v2024
    %v2036 = vmul.f32 %v250, %v2028
    %2037 = vst [vmem:[#allocation6] sm:$0xff] %v2029
    %2038 = vst [vmem:[#allocation6 + $0x8] sm:$0xff] %v2030
    %2039 = vst [vmem:[#allocation6 + $0x10] sm:$0xff] %v2031
    %2040 = vst [vmem:[#allocation6 + $0x18] sm:$0xff] %v2032
    %2041 = vst [vmem:[#allocation6 + $0x20] sm:$0xff] %v2033
    %2042 = vst [vmem:[#allocation6 + $0x28] sm:$0xff] %v2034
    %2043 = vst [vmem:[#allocation6 + $0x30] sm:$0xff] %v2035
    %2044 = vst [vmem:[#allocation6 + $0x38] sm:$0xff] %v2036
    %v2045 = vlaneseq
    %v2046 = vshrl.u32 %v2045, 7
    %v2047 = vsub.s32 1, %v2046
    %v2048 = vrot.slane %v2018, %v2047
    %v2049 = vlaneseq
    %v2050 = vshrl.u32 %v2049, 7
    %v2051 = vsub.s32 1, %v2050
    %v2052 = vrot.slane %v2020, %v2051
    %v2053 = vmul.f32 %v536, %v2048
    %v2054 = vmul.f32 %v537, %v2052
    %v2055 = vmul.f32 %v538, %v2048
    %v2056 = vmul.f32 %v539, %v2052
    %v2057 = vmul.f32 %v540, %v2048
    %v2058 = vmul.f32 %v541, %v2052
    %v2059 = vmul.f32 %v542, %v2048
    %v2060 = vmul.f32 %v543, %v2052
    %s2061 = scalar_lea.vmem [#allocation6], 64
    %2062 = vst [vmem:[%s2061] sm:$0xff] %v2053
    %2063 = vst [vmem:[%s2061 + $0x8] sm:$0xff] %v2054
    %2064 = vst [vmem:[%s2061 + $0x10] sm:$0xff] %v2055
    %2065 = vst [vmem:[%s2061 + $0x18] sm:$0xff] %v2056
    %2066 = vst [vmem:[%s2061 + $0x20] sm:$0xff] %v2057
    %2067 = vst [vmem:[%s2061 + $0x28] sm:$0xff] %v2058
    %2068 = vst [vmem:[%s2061 + $0x30] sm:$0xff] %v2059
    %2069 = vst [vmem:[%s2061 + $0x38] sm:$0xff] %v2060
    // Predicated region
    $region26: #{tpu_custom_call.1} parent=1 // pred_check
      _
    $region27: #{tpu_custom_call.1} parent=1 // pred_check_branch
      %2071 = sbr.rel (0) target = $region29
    $region28: #{tpu_custom_call.1} parent=1 // pred_region
      %s2073 = ssub.s32 2048, 2048
      %2074 = vsyncadd [#allocation5], %s2073
      %s2075 = sshll.u32 [#allocation6], 4
      %s2076 = int_to_ptr.vmem [resolvable:$true] %s2075
      %2081 = dma.vmem_to_hbm [thread:$0]  %s2076, 2048, %s5, [#allocation5], 256, 256, 16
    $region29: #{tpu_custom_call.1} parent=1 // pred_fallthru
      _
    // Predicated region
    $region30: #{tpu_custom_call.1} parent=1 // pred_check
      _
    $region31: #{tpu_custom_call.1} parent=1 // pred_check_branch
      %2083 = sbr.rel (0) target = $region33
    $region32: #{tpu_custom_call.1} parent=1 // pred_region
      %2084 = dma.done [#allocation5], 2048
    $region33: #{tpu_custom_call.1} parent=1 // pred_fallthru
      _
    %2085 = vsyncpa [#allocation4], 1
    %2086 = vsyncpa [#allocation5], 1

</llo_original>
